<compile_context>
chip_gen: v5e
topology: v5e:2x2
jax: 0.10.0
libtpu: 0.0.40
codegen_flags: <defaults>
</compile_context>

<pallas_src>
import jax
import jax.numpy as jnp
from jax import lax
from jax.experimental import pallas as pl
from jax.experimental.pallas import tpu as pltpu  # noqa: F401  (TPU backend assumed)

N = 8            # number of users (batch dim == sequence dim in this model)
ATTR = 8         # attr_dim
D = 32           # embed_dim
HEADS = 4        # num_heads
DH = D // HEADS  # head dim
NUM_CATEGORIES = 5  # predictor params exist in __init__ but are unused in forward
EPS = 1e-5


def _mm(a, b):
    return jnp.dot(a, b, preferred_element_type=jnp.float32)


def _mmT(a, b):
    # a @ b.T via dot_general (no explicit transpose materialized)
    return lax.dot_general(a, b, (((1,), (1,)), ((), ())),
                           preferred_element_type=jnp.float32)


def _layernorm(t, gamma, beta):
    mu = jnp.mean(t, axis=-1, keepdims=True)
    var = jnp.mean((t - mu) ** 2, axis=-1, keepdims=True)
    return (t - mu) * lax.rsqrt(var + EPS) * gamma + beta


# ---------------------------------------------------------------------------
# Single fused kernel: embedding, residual estimator and causal transformer.
# Grid-less: everything (< 100 KiB) lives in VMEM for the single invocation.
# ---------------------------------------------------------------------------
def _ceda_kernel(attrs_ref, pos_ref, outc_ref, we_ref, wzqkv_ref, wstk_ref,
                 vecs_ref, out_ref):
    # ---- parameters: one lane-dense vld + static in-register slices --------
    V = vecs_ref[...]                                       # (4, 4D)

    def vec(row, j):
        return V[row:row + 1, j * D:(j + 1) * D]            # (1, D)

    be, bg, b1, b2 = vec(0, 0), vec(0, 1), vec(0, 2), vec(0, 3)
    bo, bf1, bf2 = vec(1, 0), vec(1, 1), vec(1, 2)
    ln1g, ln1b, ln2g, ln2b = vec(2, 0), vec(2, 1), vec(2, 2), vec(2, 3)
    b_zqkv = V[3:4, :]                                      # (1, 4D) = [bz|bq|bk|bv]
    wg, w1, w2, wo, wf1, wf2 = [wstk_ref[i] for i in range(6)]

    # ---- user embedding (in-register concat, single K=ATTR+D matmul) -------
    x_in = jnp.concatenate([attrs_ref[...], pos_ref[...]], axis=-1)   # (N, ATTR+D)
    E = _mm(x_in, we_ref[...]) + be                                   # (N, D)

    # ---- fused z|q|k|v projection of E (one lane-dense (N, 4D) matmul) -----
    EW = _mm(E, wzqkv_ref[...]) + b_zqkv                              # (N, 4D)
    z = jnp.maximum(EW[:, 0:D], 0.0)
    qE, kE, vE = EW[:, D:2 * D], EW[:, 2 * D:3 * D], EW[:, 3 * D:4 * D]

    # ---- residual estimator -------------------------------------------------
    g = jnp.maximum(_mm(outc_ref[...], wg) + bg, 0.0)
    h1 = jnp.maximum(_mm(z - g, w1) + b1, 0.0)
    r = _mm(h1, w2) + b2                                              # (N, D)

    # residual through the same fused weight (bias applied once, on the E side;
    # the z lanes of RW are unused and the kR slice is never needed: its
    # contribution to the scores is constant over the softmax axis).
    RW = _mm(r, wzqkv_ref[...])                                       # (N, 4D)
    qR, vR = RW[:, D:2 * D], RW[:, 3 * D:4 * D]

    # ---- multi-head attention on x_adj[b,s,:] = E[s,:] - r[b,:] ------------
    # Tensors are kept s-major (leading dim = s, sublanes = b) so the final
    # output store is lane-dense with only leading-dim indexing.
    scale = 1.0 / (DH ** 0.5)
    QQ = jnp.concatenate([qE, qR], axis=0)                            # (2N, D)
    heads = []
    for h in range(HEADS):                                            # static unroll
        lo, hi = h * DH, (h + 1) * DH
        AB = _mmT(QQ[:, lo:hi], kE[:, lo:hi]) * scale                 # (2N, N): 1 push
        A, B = AB[0:N, :], AB[N:2 * N, :]                             # (s,t), (b,t)
        S = A[:, None, :] - B[None, :, :]                             # (s, b, t)
        S = S - jnp.max(S, axis=-1, keepdims=True)
        P = jnp.exp(S)
        denom = jnp.sum(P, axis=-1, keepdims=True)                    # (s, b, 1)
        inv = pl.reciprocal(denom, approx=True)                       # EUP slot
        # P @ v_adj = P @ vE_h - rowsum(P) * vR_h[b]   (one MXU push per head)
        PV = _mm(P.reshape(N * N, N), vE[:, lo:hi]).reshape(N, N, DH)
        heads.append((PV - denom * vR[:, lo:hi][None, :, :]) * inv)   # (s, b, DH)

    o3 = jnp.concatenate(heads, axis=-1)                              # (s, b, D)
    attn = _mm(o3.reshape(N * N, D), wo) + bo                         # rows r = s*N + b

    # ---- (+E) residual add, LN, Linear -> LeakyReLU -> Linear, LN ----------
    y3 = attn.reshape(N, N, D) + E[:, None, :]        # broadcast E[s] over b (no tile)
    y2 = _layernorm(y3.reshape(N * N, D), ln1g, ln1b)
    f = _mm(y2, wf1) + bf1
    f = jnp.where(f >= 0, f, 0.01 * f)                # LeakyReLU(0.01); Dropout=id (eval)
    f = _mm(f, wf2) + bf2
    out2 = _layernorm(f, ln2g, ln2b)                  # (N*N, D), rows r = s*N + b

    # ---- single lane-dense (N, N*D + 4D) = (8, 384) store -------------------
    out3 = out2.reshape(N, N, D)                                      # [s, b, d]
    out_ref[...] = jnp.concatenate(
        [out3[s] for s in range(N)] + [E, z, g, r], axis=-1)


# ---------------------------------------------------------------------------
# Parameter packing (done once, outside jit) + wrapper.
# ---------------------------------------------------------------------------
def pack_params(p):
    zero = jnp.zeros((1, D), jnp.float32)
    vecs = jnp.concatenate([
        jnp.concatenate([p['be'], p['bg'], p['b1'], p['b2']], axis=1),
        jnp.concatenate([p['bo'], p['bf1'], p['bf2'], zero], axis=1),
        jnp.concatenate([p['ln1g'], p['ln1b'], p['ln2g'], p['ln2b']], axis=1),
        jnp.concatenate([p['bz'], p['bq'], p['bk'], p['bv']], axis=1),
    ], axis=0)                                                            # (4, 4D)
    return {
        'we': jnp.concatenate([p['wea'], p['wep']], axis=0),              # (ATTR+D, D)
        'w_zqkv': jnp.concatenate([p['wz'], p['wq'], p['wk'], p['wv']],
                                  axis=1),                                # (D, 4D)
        'wstk': jnp.stack([p['wg'], p['w1'], p['w2'], p['wo'],
                           p['wf1'], p['wf2']], axis=0),                  # (6, D, D)
        'vecs': vecs,
    }


@jax.jit
def ceda_forward(attrs, pos_enc, outcomes, packed):
    out = pl.pallas_call(
        _ceda_kernel,
        out_shape=jax.ShapeDtypeStruct((N, (N + 4) * D), jnp.float32),
        cost_estimate=pl.CostEstimate(flops=640_000, transcendentals=2_500,
                                      bytes_accessed=64_000),
    )(attrs, pos_enc, outcomes, packed['we'], packed['w_zqkv'],
      packed['wstk'], packed['vecs'])
    unbiased = out[:, :N * D].reshape(N, N, D)
    E, z, g, residual = (out[:, (N + i) * D:(N + i + 1) * D] for i in range(4))
    return unbiased, z, g, residual, E


# ---------------------------------------------------------------------------
# Deterministic parameter init (weights stored as (in_features, out_features))
# ---------------------------------------------------------------------------
def init_params(key):
    keys = iter(jax.random.split(key, 40))

    def nrm(shape, scale):
        return jax.random.normal(next(keys), shape, jnp.float32) * scale

    p = {
        # UserDualEmbedding (split weight: attrs part + pos_enc part, one bias)
        'wea': nrm((ATTR, D), 0.15), 'wep': nrm((D, D), 0.15), 'be': nrm((1, D), 0.02),
        # ResidualEstimator
        'wz': nrm((D, D), 0.15), 'bz': nrm((1, D), 0.02),
        'wg': nrm((D, D), 0.15), 'bg': nrm((1, D), 0.02),
        'w1': nrm((D, D), 0.15), 'b1': nrm((1, D), 0.02),
        'w2': nrm((D, D), 0.15), 'b2': nrm((1, D), 0.02),
        # MultiheadAttention (in_proj split into q/k/v) + out_proj
        'wq': nrm((D, D), 0.15), 'bq': nrm((1, D), 0.02),
        'wk': nrm((D, D), 0.15), 'bk': nrm((1, D), 0.02),
        'wv': nrm((D, D), 0.15), 'bv': nrm((1, D), 0.02),
        'wo': nrm((D, D), 0.15), 'bo': nrm((1, D), 0.02),
        # FFN: LN -> Linear -> LeakyReLU -> Dropout -> Linear -> LN
        'ln1g': jnp.ones((1, D), jnp.float32), 'ln1b': jnp.zeros((1, D), jnp.float32),
        'wf1': nrm((D, D), 0.15), 'bf1': nrm((1, D), 0.02),
        'wf2': nrm((D, D), 0.15), 'bf2': nrm((1, D), 0.02),
        'ln2g': jnp.ones((1, D), jnp.float32), 'ln2b': jnp.zeros((1, D), jnp.float32),
    }
    # TODO(synk): SocialDiffusionPredictor params (M, Wc) are defined in
    # __init__ but never used in CEDA.forward, so they are not materialized.
    return p


# ---------------------------------------------------------------------------
# Pure-JAX reference (mirrors the PyTorch math) for a numerical self-check.
# ---------------------------------------------------------------------------
def reference_forward(attrs, pos_enc, outcomes, p):
    E = attrs @ p['wea'] + pos_enc @ p['wep'] + p['be']
    z = jax.nn.relu(E @ p['wz'] + p['bz'])
    g = jax.nn.relu(outcomes @ p['wg'] + p['bg'])
    residual = jax.nn.relu((z - g) @ p['w1'] + p['b1']) @ p['w2'] + p['b2']

    x = E[None, :, :] - residual[:, None, :]          # (N, N, D)
    q = x @ p['wq'] + p['bq']
    k = x @ p['wk'] + p['bk']
    v = x @ p['wv'] + p['bv']
    qh = q.reshape(N, N, HEADS, DH)
    kh = k.reshape(N, N, HEADS, DH)
    vh = v.reshape(N, N, HEADS, DH)
    s = jnp.einsum('bqhd,bkhd->bhqk', qh, kh) / (DH ** 0.5)
    pa = jax.nn.softmax(s, axis=-1)
    o = jnp.einsum('bhqk,bkhd->bqhd', pa, vh).reshape(N, N, D)
    attn = o @ p['wo'] + p['bo']
    y = attn + E[None, :, :]

    def ln(t, gm, bt):
        mu = t.mean(-1, keepdims=True)
        var = ((t - mu) ** 2).mean(-1, keepdims=True)
        return (t - mu) / jnp.sqrt(var + EPS) * gm + bt

    y = ln(y, p['ln1g'], p['ln1b'])
    f = y @ p['wf1'] + p['bf1']
    f = jnp.where(f >= 0, f, 0.01 * f)
    f = f @ p['wf2'] + p['bf2']
    out = ln(f, p['ln2g'], p['ln2b'])
    return out, z, g, residual, E


if __name__ == "__main__":
    key = jax.random.PRNGKey(0)
    k_a, k_p, k_o, k_w = jax.random.split(key, 4)
    attrs = jax.random.normal(k_a, (N, ATTR), jnp.float32)
    pos_enc = jax.random.normal(k_p, (N, D), jnp.float32)
    outcomes = jax.random.normal(k_o, (N, D), jnp.float32)
    params = init_params(k_w)
    packed = pack_params(params)          # pre-packed once, outside jit

    outs = jax.block_until_ready(ceda_forward(attrs, pos_enc, outcomes, packed))

    refs = reference_forward(attrs, pos_enc, outcomes, params)
    names = ('unbiased', 'z', 'g', 'residual', 'E')
    for name, a, b in zip(names, outs, refs):
        assert a.shape == b.shape, (name, a.shape, b.shape)
        err = float(jnp.max(jnp.abs(a - b)))
        assert err < 2e-2, (name, err)

    print("KERNEL_OK")
</pallas_src>

<mosaic_0001>
module attributes {stable_mosaic.version = 11 : i64} {
  func.func @_ceda_kernel(%arg0: memref<8x8xf32, #tpu.memory_space<vmem>>, %arg1: memref<8x32xf32, #tpu.memory_space<vmem>>, %arg2: memref<8x32xf32, #tpu.memory_space<vmem>>, %arg3: memref<40x32xf32, #tpu.memory_space<vmem>>, %arg4: memref<32x128xf32, #tpu.memory_space<vmem>>, %arg5: memref<6x32x32xf32, #tpu.memory_space<vmem>>, %arg6: memref<4x128xf32, #tpu.memory_space<vmem>>, %arg7: memref<8x384xf32, #tpu.memory_space<vmem>>) attributes {dimension_semantics = [], scalar_prefetch = 0 : i64, scratch_operands = 0 : i64, tpu.core_type = #tpu.core_type<tc>} {
    %c0 = arith.constant 0 : index
    %c0_0 = arith.constant 0 : index
    %0 = vector.load %arg6[%c0, %c0_0] : memref<4x128xf32, #tpu.memory_space<vmem>>, vector<4x128xf32>
    %1 = vector.extract_strided_slice %0 {offsets = [0, 0], sizes = [1, 32], strides = [1, 1]} : vector<4x128xf32> to vector<1x32xf32>
    %2 = vector.extract_strided_slice %0 {offsets = [0, 32], sizes = [1, 32], strides = [1, 1]} : vector<4x128xf32> to vector<1x32xf32>
    %3 = vector.extract_strided_slice %0 {offsets = [0, 64], sizes = [1, 32], strides = [1, 1]} : vector<4x128xf32> to vector<1x32xf32>
    %4 = vector.extract_strided_slice %0 {offsets = [0, 96], sizes = [1, 32], strides = [1, 1]} : vector<4x128xf32> to vector<1x32xf32>
    %5 = vector.extract_strided_slice %0 {offsets = [1, 0], sizes = [1, 32], strides = [1, 1]} : vector<4x128xf32> to vector<1x32xf32>
    %6 = vector.extract_strided_slice %0 {offsets = [1, 32], sizes = [1, 32], strides = [1, 1]} : vector<4x128xf32> to vector<1x32xf32>
    %7 = vector.extract_strided_slice %0 {offsets = [1, 64], sizes = [1, 32], strides = [1, 1]} : vector<4x128xf32> to vector<1x32xf32>
    %8 = vector.extract_strided_slice %0 {offsets = [2, 0], sizes = [1, 32], strides = [1, 1]} : vector<4x128xf32> to vector<1x32xf32>
    %9 = vector.extract_strided_slice %0 {offsets = [2, 32], sizes = [1, 32], strides = [1, 1]} : vector<4x128xf32> to vector<1x32xf32>
    %10 = vector.extract_strided_slice %0 {offsets = [2, 64], sizes = [1, 32], strides = [1, 1]} : vector<4x128xf32> to vector<1x32xf32>
    %11 = vector.extract_strided_slice %0 {offsets = [2, 96], sizes = [1, 32], strides = [1, 1]} : vector<4x128xf32> to vector<1x32xf32>
    %12 = vector.extract_strided_slice %0 {offsets = [3, 0], sizes = [1, 128], strides = [1, 1]} : vector<4x128xf32> to vector<1x128xf32>
    %c0_1 = arith.constant 0 : index
    %c0_2 = arith.constant 0 : index
    %c0_3 = arith.constant 0 : index
    %13 = vector.load %arg5[%c0_1, %c0_2, %c0_3] : memref<6x32x32xf32, #tpu.memory_space<vmem>>, vector<1x32x32xf32>
    %14 = vector.shape_cast %13 : vector<1x32x32xf32> to vector<32x32xf32>
    %c1 = arith.constant 1 : index
    %c0_4 = arith.constant 0 : index
    %c0_5 = arith.constant 0 : index
    %15 = vector.load %arg5[%c1, %c0_4, %c0_5] : memref<6x32x32xf32, #tpu.memory_space<vmem>>, vector<1x32x32xf32>
    %16 = vector.shape_cast %15 : vector<1x32x32xf32> to vector<32x32xf32>
    %c2 = arith.constant 2 : index
    %c0_6 = arith.constant 0 : index
    %c0_7 = arith.constant 0 : index
    %17 = vector.load %arg5[%c2, %c0_6, %c0_7] : memref<6x32x32xf32, #tpu.memory_space<vmem>>, vector<1x32x32xf32>
    %18 = vector.shape_cast %17 : vector<1x32x32xf32> to vector<32x32xf32>
    %c3 = arith.constant 3 : index
    %c0_8 = arith.constant 0 : index
    %c0_9 = arith.constant 0 : index
    %19 = vector.load %arg5[%c3, %c0_8, %c0_9] : memref<6x32x32xf32, #tpu.memory_space<vmem>>, vector<1x32x32xf32>
    %20 = vector.shape_cast %19 : vector<1x32x32xf32> to vector<32x32xf32>
    %c4 = arith.constant 4 : index
    %c0_10 = arith.constant 0 : index
    %c0_11 = arith.constant 0 : index
    %21 = vector.load %arg5[%c4, %c0_10, %c0_11] : memref<6x32x32xf32, #tpu.memory_space<vmem>>, vector<1x32x32xf32>
    %22 = vector.shape_cast %21 : vector<1x32x32xf32> to vector<32x32xf32>
    %c5 = arith.constant 5 : index
    %c0_12 = arith.constant 0 : index
    %c0_13 = arith.constant 0 : index
    %23 = vector.load %arg5[%c5, %c0_12, %c0_13] : memref<6x32x32xf32, #tpu.memory_space<vmem>>, vector<1x32x32xf32>
    %24 = vector.shape_cast %23 : vector<1x32x32xf32> to vector<32x32xf32>
    %c0_14 = arith.constant 0 : index
    %c0_15 = arith.constant 0 : index
    %25 = vector.load %arg0[%c0_14, %c0_15] : memref<8x8xf32, #tpu.memory_space<vmem>>, vector<8x8xf32>
    %c0_16 = arith.constant 0 : index
    %c0_17 = arith.constant 0 : index
    %26 = vector.load %arg1[%c0_16, %c0_17] : memref<8x32xf32, #tpu.memory_space<vmem>>, vector<8x32xf32>
    %27 = tpu.concatenate %25, %26 in 1 : vector<8x8xf32>, vector<8x32xf32> -> vector<8x40xf32>
    %c0_18 = arith.constant 0 : index
    %c0_19 = arith.constant 0 : index
    %28 = vector.load %arg3[%c0_18, %c0_19] : memref<40x32xf32, #tpu.memory_space<vmem>>, vector<40x32xf32>
    %cst = arith.constant dense<0.000000e+00> : vector<8x32xf32>
    %29 = tpu.matmul %27, %28, %cst {dimension_numbers = #tpu.dot_dimension_numbers<[1], [0], [0], [1], [0, 0, 1, 1], [], []>} : vector<8x40xf32>, vector<40x32xf32>, vector<8x32xf32> -> vector<8x32xf32>
    %30 = vector.broadcast %1 : vector<1x32xf32> to vector<8x32xf32>
    %31 = arith.addf %29, %30 : vector<8x32xf32>
    %c0_20 = arith.constant 0 : index
    %c0_21 = arith.constant 0 : index
    %32 = vector.load %arg4[%c0_20, %c0_21] : memref<32x128xf32, #tpu.memory_space<vmem>>, vector<32x128xf32>
    %cst_22 = arith.constant dense<0.000000e+00> : vector<8x128xf32>
    %33 = tpu.matmul %31, %32, %cst_22 {dimension_numbers = #tpu.dot_dimension_numbers<[1], [0], [0], [1], [0, 0, 1, 1], [], []>} : vector<8x32xf32>, vector<32x128xf32>, vector<8x128xf32> -> vector<8x128xf32>
    %34 = vector.broadcast %12 : vector<1x128xf32> to vector<8x128xf32>
    %35 = arith.addf %33, %34 : vector<8x128xf32>
    %36 = vector.extract_strided_slice %35 {offsets = [0, 0], sizes = [8, 32], strides = [1, 1]} : vector<8x128xf32> to vector<8x32xf32>
    %cst_23 = arith.constant 0.000000e+00 : f32
    %37 = vector.broadcast %cst_23 : f32 to vector<8x32xf32>
    %38 = arith.maximumf %36, %37 : vector<8x32xf32>
    %39 = vector.extract_strided_slice %35 {offsets = [0, 32], sizes = [8, 32], strides = [1, 1]} : vector<8x128xf32> to vector<8x32xf32>
    %40 = vector.extract_strided_slice %35 {offsets = [0, 64], sizes = [8, 32], strides = [1, 1]} : vector<8x128xf32> to vector<8x32xf32>
    %41 = vector.extract_strided_slice %35 {offsets = [0, 96], sizes = [8, 32], strides = [1, 1]} : vector<8x128xf32> to vector<8x32xf32>
    %c0_24 = arith.constant 0 : index
    %c0_25 = arith.constant 0 : index
    %42 = vector.load %arg2[%c0_24, %c0_25] : memref<8x32xf32, #tpu.memory_space<vmem>>, vector<8x32xf32>
    %cst_26 = arith.constant dense<0.000000e+00> : vector<8x32xf32>
    %43 = tpu.matmul %42, %14, %cst_26 {dimension_numbers = #tpu.dot_dimension_numbers<[1], [0], [0], [1], [0, 0, 1, 1], [], []>} : vector<8x32xf32>, vector<32x32xf32>, vector<8x32xf32> -> vector<8x32xf32>
    %44 = vector.broadcast %2 : vector<1x32xf32> to vector<8x32xf32>
    %45 = arith.addf %43, %44 : vector<8x32xf32>
    %cst_27 = arith.constant 0.000000e+00 : f32
    %46 = vector.broadcast %cst_27 : f32 to vector<8x32xf32>
    %47 = arith.maximumf %45, %46 : vector<8x32xf32>
    %48 = arith.subf %38, %47 : vector<8x32xf32>
    %cst_28 = arith.constant dense<0.000000e+00> : vector<8x32xf32>
    %49 = tpu.matmul %48, %16, %cst_28 {dimension_numbers = #tpu.dot_dimension_numbers<[1], [0], [0], [1], [0, 0, 1, 1], [], []>} : vector<8x32xf32>, vector<32x32xf32>, vector<8x32xf32> -> vector<8x32xf32>
    %50 = vector.broadcast %3 : vector<1x32xf32> to vector<8x32xf32>
    %51 = arith.addf %49, %50 : vector<8x32xf32>
    %cst_29 = arith.constant 0.000000e+00 : f32
    %52 = vector.broadcast %cst_29 : f32 to vector<8x32xf32>
    %53 = arith.maximumf %51, %52 : vector<8x32xf32>
    %cst_30 = arith.constant dense<0.000000e+00> : vector<8x32xf32>
    %54 = tpu.matmul %53, %18, %cst_30 {dimension_numbers = #tpu.dot_dimension_numbers<[1], [0], [0], [1], [0, 0, 1, 1], [], []>} : vector<8x32xf32>, vector<32x32xf32>, vector<8x32xf32> -> vector<8x32xf32>
    %55 = vector.broadcast %4 : vector<1x32xf32> to vector<8x32xf32>
    %56 = arith.addf %54, %55 : vector<8x32xf32>
    %c0_31 = arith.constant 0 : index
    %c0_32 = arith.constant 0 : index
    %57 = vector.load %arg4[%c0_31, %c0_32] : memref<32x128xf32, #tpu.memory_space<vmem>>, vector<32x128xf32>
    %cst_33 = arith.constant dense<0.000000e+00> : vector<8x128xf32>
    %58 = tpu.matmul %56, %57, %cst_33 {dimension_numbers = #tpu.dot_dimension_numbers<[1], [0], [0], [1], [0, 0, 1, 1], [], []>} : vector<8x32xf32>, vector<32x128xf32>, vector<8x128xf32> -> vector<8x128xf32>
    %59 = vector.extract_strided_slice %58 {offsets = [0, 32], sizes = [8, 32], strides = [1, 1]} : vector<8x128xf32> to vector<8x32xf32>
    %60 = vector.extract_strided_slice %58 {offsets = [0, 96], sizes = [8, 32], strides = [1, 1]} : vector<8x128xf32> to vector<8x32xf32>
    %61 = tpu.concatenate %39, %59 in 0 : vector<8x32xf32>, vector<8x32xf32> -> vector<16x32xf32>
    %62 = vector.extract_strided_slice %61 {offsets = [0, 0], sizes = [16, 8], strides = [1, 1]} : vector<16x32xf32> to vector<16x8xf32>
    %63 = vector.extract_strided_slice %40 {offsets = [0, 0], sizes = [8, 8], strides = [1, 1]} : vector<8x32xf32> to vector<8x8xf32>
    %cst_34 = arith.constant dense<0.000000e+00> : vector<16x8xf32>
    %64 = tpu.matmul %62, %63, %cst_34 {dimension_numbers = #tpu.dot_dimension_numbers<[1], [1], [0], [0], [0, 0, 1, 0], [], []>} : vector<16x8xf32>, vector<8x8xf32>, vector<16x8xf32> -> vector<16x8xf32>
    %cst_35 = arith.constant 0.353553385 : f32
    %65 = vector.broadcast %cst_35 : f32 to vector<16x8xf32>
    %66 = arith.mulf %64, %65 : vector<16x8xf32>
    %67 = vector.extract_strided_slice %66 {offsets = [0, 0], sizes = [8, 8], strides = [1, 1]} : vector<16x8xf32> to vector<8x8xf32>
    %68 = vector.extract_strided_slice %66 {offsets = [8, 0], sizes = [8, 8], strides = [1, 1]} : vector<16x8xf32> to vector<8x8xf32>
    %69 = vector.shape_cast %67 : vector<8x8xf32> to vector<8x1x8xf32>
    %70 = vector.shape_cast %68 : vector<8x8xf32> to vector<1x8x8xf32>
    %71 = vector.broadcast %69 : vector<8x1x8xf32> to vector<8x8x8xf32>
    %72 = vector.broadcast %70 : vector<1x8x8xf32> to vector<8x8x8xf32>
    %73 = arith.subf %71, %72 : vector<8x8x8xf32>
    %cst_36 = arith.constant dense<0xFF800000> : vector<8x8xf32>
    %74 = vector.multi_reduction <maximumf>, %73, %cst_36 [2] : vector<8x8x8xf32> to vector<8x8xf32>
    %75 = vector.shape_cast %74 : vector<8x8xf32> to vector<8x8x1xf32>
    %76 = vector.broadcast %75 : vector<8x8x1xf32> to vector<8x8x8xf32>
    %77 = arith.subf %73, %76 : vector<8x8x8xf32>
    %78 = math.exp %77 : vector<8x8x8xf32>
    %cst_37 = arith.constant dense<0.000000e+00> : vector<8x8xf32>
    %79 = vector.multi_reduction <add>, %78, %cst_37 [2] : vector<8x8x8xf32> to vector<8x8xf32>
    %80 = vector.shape_cast %79 : vector<8x8xf32> to vector<8x8x1xf32>
    %81 = tpu.reciprocal %80 {approx = true} : vector<8x8x1xf32> -> vector<8x8x1xf32>
    %82 = vector.shape_cast %78 : vector<8x8x8xf32> to vector<64x8xf32>
    %83 = vector.extract_strided_slice %41 {offsets = [0, 0], sizes = [8, 8], strides = [1, 1]} : vector<8x32xf32> to vector<8x8xf32>
    %cst_38 = arith.constant dense<0.000000e+00> : vector<64x8xf32>
    %84 = tpu.matmul %82, %83, %cst_38 {dimension_numbers = #tpu.dot_dimension_numbers<[1], [0], [0], [1], [0, 0, 1, 1], [], []>} : vector<64x8xf32>, vector<8x8xf32>, vector<64x8xf32> -> vector<64x8xf32>
    %85 = vector.shape_cast %84 : vector<64x8xf32> to vector<8x8x8xf32>
    %86 = vector.extract_strided_slice %60 {offsets = [0, 0], sizes = [8, 8], strides = [1, 1]} : vector<8x32xf32> to vector<8x8xf32>
    %87 = vector.shape_cast %86 : vector<8x8xf32> to vector<1x8x8xf32>
    %88 = vector.broadcast %80 : vector<8x8x1xf32> to vector<8x8x8xf32>
    %89 = vector.broadcast %87 : vector<1x8x8xf32> to vector<8x8x8xf32>
    %90 = arith.mulf %88, %89 : vector<8x8x8xf32>
    %91 = arith.subf %85, %90 : vector<8x8x8xf32>
    %92 = vector.broadcast %81 : vector<8x8x1xf32> to vector<8x8x8xf32>
    %93 = arith.mulf %91, %92 : vector<8x8x8xf32>
    %94 = vector.extract_strided_slice %61 {offsets = [0, 8], sizes = [16, 8], strides = [1, 1]} : vector<16x32xf32> to vector<16x8xf32>
    %95 = vector.extract_strided_slice %40 {offsets = [0, 8], sizes = [8, 8], strides = [1, 1]} : vector<8x32xf32> to vector<8x8xf32>
    %cst_39 = arith.constant dense<0.000000e+00> : vector<16x8xf32>
    %96 = tpu.matmul %94, %95, %cst_39 {dimension_numbers = #tpu.dot_dimension_numbers<[1], [1], [0], [0], [0, 0, 1, 0], [], []>} : vector<16x8xf32>, vector<8x8xf32>, vector<16x8xf32> -> vector<16x8xf32>
    %cst_40 = arith.constant 0.353553385 : f32
    %97 = vector.broadcast %cst_40 : f32 to vector<16x8xf32>
    %98 = arith.mulf %96, %97 : vector<16x8xf32>
    %99 = vector.extract_strided_slice %98 {offsets = [0, 0], sizes = [8, 8], strides = [1, 1]} : vector<16x8xf32> to vector<8x8xf32>
    %100 = vector.extract_strided_slice %98 {offsets = [8, 0], sizes = [8, 8], strides = [1, 1]} : vector<16x8xf32> to vector<8x8xf32>
    %101 = vector.shape_cast %99 : vector<8x8xf32> to vector<8x1x8xf32>
    %102 = vector.shape_cast %100 : vector<8x8xf32> to vector<1x8x8xf32>
    %103 = vector.broadcast %101 : vector<8x1x8xf32> to vector<8x8x8xf32>
    %104 = vector.broadcast %102 : vector<1x8x8xf32> to vector<8x8x8xf32>
    %105 = arith.subf %103, %104 : vector<8x8x8xf32>
    %cst_41 = arith.constant dense<0xFF800000> : vector<8x8xf32>
    %106 = vector.multi_reduction <maximumf>, %105, %cst_41 [2] : vector<8x8x8xf32> to vector<8x8xf32>
    %107 = vector.shape_cast %106 : vector<8x8xf32> to vector<8x8x1xf32>
    %108 = vector.broadcast %107 : vector<8x8x1xf32> to vector<8x8x8xf32>
    %109 = arith.subf %105, %108 : vector<8x8x8xf32>
    %110 = math.exp %109 : vector<8x8x8xf32>
    %cst_42 = arith.constant dense<0.000000e+00> : vector<8x8xf32>
    %111 = vector.multi_reduction <add>, %110, %cst_42 [2] : vector<8x8x8xf32> to vector<8x8xf32>
    %112 = vector.shape_cast %111 : vector<8x8xf32> to vector<8x8x1xf32>
    %113 = tpu.reciprocal %112 {approx = true} : vector<8x8x1xf32> -> vector<8x8x1xf32>
    %114 = vector.shape_cast %110 : vector<8x8x8xf32> to vector<64x8xf32>
    %115 = vector.extract_strided_slice %41 {offsets = [0, 8], sizes = [8, 8], strides = [1, 1]} : vector<8x32xf32> to vector<8x8xf32>
    %cst_43 = arith.constant dense<0.000000e+00> : vector<64x8xf32>
    %116 = tpu.matmul %114, %115, %cst_43 {dimension_numbers = #tpu.dot_dimension_numbers<[1], [0], [0], [1], [0, 0, 1, 1], [], []>} : vector<64x8xf32>, vector<8x8xf32>, vector<64x8xf32> -> vector<64x8xf32>
    %117 = vector.shape_cast %116 : vector<64x8xf32> to vector<8x8x8xf32>
    %118 = vector.extract_strided_slice %60 {offsets = [0, 8], sizes = [8, 8], strides = [1, 1]} : vector<8x32xf32> to vector<8x8xf32>
    %119 = vector.shape_cast %118 : vector<8x8xf32> to vector<1x8x8xf32>
    %120 = vector.broadcast %112 : vector<8x8x1xf32> to vector<8x8x8xf32>
    %121 = vector.broadcast %119 : vector<1x8x8xf32> to vector<8x8x8xf32>
    %122 = arith.mulf %120, %121 : vector<8x8x8xf32>
    %123 = arith.subf %117, %122 : vector<8x8x8xf32>
    %124 = vector.broadcast %113 : vector<8x8x1xf32> to vector<8x8x8xf32>
    %125 = arith.mulf %123, %124 : vector<8x8x8xf32>
    %126 = vector.extract_strided_slice %61 {offsets = [0, 16], sizes = [16, 8], strides = [1, 1]} : vector<16x32xf32> to vector<16x8xf32>
    %127 = vector.extract_strided_slice %40 {offsets = [0, 16], sizes = [8, 8], strides = [1, 1]} : vector<8x32xf32> to vector<8x8xf32>
    %cst_44 = arith.constant dense<0.000000e+00> : vector<16x8xf32>
    %128 = tpu.matmul %126, %127, %cst_44 {dimension_numbers = #tpu.dot_dimension_numbers<[1], [1], [0], [0], [0, 0, 1, 0], [], []>} : vector<16x8xf32>, vector<8x8xf32>, vector<16x8xf32> -> vector<16x8xf32>
    %cst_45 = arith.constant 0.353553385 : f32
    %129 = vector.broadcast %cst_45 : f32 to vector<16x8xf32>
    %130 = arith.mulf %128, %129 : vector<16x8xf32>
    %131 = vector.extract_strided_slice %130 {offsets = [0, 0], sizes = [8, 8], strides = [1, 1]} : vector<16x8xf32> to vector<8x8xf32>
    %132 = vector.extract_strided_slice %130 {offsets = [8, 0], sizes = [8, 8], strides = [1, 1]} : vector<16x8xf32> to vector<8x8xf32>
    %133 = vector.shape_cast %131 : vector<8x8xf32> to vector<8x1x8xf32>
    %134 = vector.shape_cast %132 : vector<8x8xf32> to vector<1x8x8xf32>
    %135 = vector.broadcast %133 : vector<8x1x8xf32> to vector<8x8x8xf32>
    %136 = vector.broadcast %134 : vector<1x8x8xf32> to vector<8x8x8xf32>
    %137 = arith.subf %135, %136 : vector<8x8x8xf32>
    %cst_46 = arith.constant dense<0xFF800000> : vector<8x8xf32>
    %138 = vector.multi_reduction <maximumf>, %137, %cst_46 [2] : vector<8x8x8xf32> to vector<8x8xf32>
    %139 = vector.shape_cast %138 : vector<8x8xf32> to vector<8x8x1xf32>
    %140 = vector.broadcast %139 : vector<8x8x1xf32> to vector<8x8x8xf32>
    %141 = arith.subf %137, %140 : vector<8x8x8xf32>
    %142 = math.exp %141 : vector<8x8x8xf32>
    %cst_47 = arith.constant dense<0.000000e+00> : vector<8x8xf32>
    %143 = vector.multi_reduction <add>, %142, %cst_47 [2] : vector<8x8x8xf32> to vector<8x8xf32>
    %144 = vector.shape_cast %143 : vector<8x8xf32> to vector<8x8x1xf32>
    %145 = tpu.reciprocal %144 {approx = true} : vector<8x8x1xf32> -> vector<8x8x1xf32>
    %146 = vector.shape_cast %142 : vector<8x8x8xf32> to vector<64x8xf32>
    %147 = vector.extract_strided_slice %41 {offsets = [0, 16], sizes = [8, 8], strides = [1, 1]} : vector<8x32xf32> to vector<8x8xf32>
    %cst_48 = arith.constant dense<0.000000e+00> : vector<64x8xf32>
    %148 = tpu.matmul %146, %147, %cst_48 {dimension_numbers = #tpu.dot_dimension_numbers<[1], [0], [0], [1], [0, 0, 1, 1], [], []>} : vector<64x8xf32>, vector<8x8xf32>, vector<64x8xf32> -> vector<64x8xf32>
    %149 = vector.shape_cast %148 : vector<64x8xf32> to vector<8x8x8xf32>
    %150 = vector.extract_strided_slice %60 {offsets = [0, 16], sizes = [8, 8], strides = [1, 1]} : vector<8x32xf32> to vector<8x8xf32>
    %151 = vector.shape_cast %150 : vector<8x8xf32> to vector<1x8x8xf32>
    %152 = vector.broadcast %144 : vector<8x8x1xf32> to vector<8x8x8xf32>
    %153 = vector.broadcast %151 : vector<1x8x8xf32> to vector<8x8x8xf32>
    %154 = arith.mulf %152, %153 : vector<8x8x8xf32>
    %155 = arith.subf %149, %154 : vector<8x8x8xf32>
    %156 = vector.broadcast %145 : vector<8x8x1xf32> to vector<8x8x8xf32>
    %157 = arith.mulf %155, %156 : vector<8x8x8xf32>
    %158 = vector.extract_strided_slice %61 {offsets = [0, 24], sizes = [16, 8], strides = [1, 1]} : vector<16x32xf32> to vector<16x8xf32>
    %159 = vector.extract_strided_slice %40 {offsets = [0, 24], sizes = [8, 8], strides = [1, 1]} : vector<8x32xf32> to vector<8x8xf32>
    %cst_49 = arith.constant dense<0.000000e+00> : vector<16x8xf32>
    %160 = tpu.matmul %158, %159, %cst_49 {dimension_numbers = #tpu.dot_dimension_numbers<[1], [1], [0], [0], [0, 0, 1, 0], [], []>} : vector<16x8xf32>, vector<8x8xf32>, vector<16x8xf32> -> vector<16x8xf32>
    %cst_50 = arith.constant 0.353553385 : f32
    %161 = vector.broadcast %cst_50 : f32 to vector<16x8xf32>
    %162 = arith.mulf %160, %161 : vector<16x8xf32>
    %163 = vector.extract_strided_slice %162 {offsets = [0, 0], sizes = [8, 8], strides = [1, 1]} : vector<16x8xf32> to vector<8x8xf32>
    %164 = vector.extract_strided_slice %162 {offsets = [8, 0], sizes = [8, 8], strides = [1, 1]} : vector<16x8xf32> to vector<8x8xf32>
    %165 = vector.shape_cast %163 : vector<8x8xf32> to vector<8x1x8xf32>
    %166 = vector.shape_cast %164 : vector<8x8xf32> to vector<1x8x8xf32>
    %167 = vector.broadcast %165 : vector<8x1x8xf32> to vector<8x8x8xf32>
    %168 = vector.broadcast %166 : vector<1x8x8xf32> to vector<8x8x8xf32>
    %169 = arith.subf %167, %168 : vector<8x8x8xf32>
    %cst_51 = arith.constant dense<0xFF800000> : vector<8x8xf32>
    %170 = vector.multi_reduction <maximumf>, %169, %cst_51 [2] : vector<8x8x8xf32> to vector<8x8xf32>
    %171 = vector.shape_cast %170 : vector<8x8xf32> to vector<8x8x1xf32>
    %172 = vector.broadcast %171 : vector<8x8x1xf32> to vector<8x8x8xf32>
    %173 = arith.subf %169, %172 : vector<8x8x8xf32>
    %174 = math.exp %173 : vector<8x8x8xf32>
    %cst_52 = arith.constant dense<0.000000e+00> : vector<8x8xf32>
    %175 = vector.multi_reduction <add>, %174, %cst_52 [2] : vector<8x8x8xf32> to vector<8x8xf32>
    %176 = vector.shape_cast %175 : vector<8x8xf32> to vector<8x8x1xf32>
    %177 = tpu.reciprocal %176 {approx = true} : vector<8x8x1xf32> -> vector<8x8x1xf32>
    %178 = vector.shape_cast %174 : vector<8x8x8xf32> to vector<64x8xf32>
    %179 = vector.extract_strided_slice %41 {offsets = [0, 24], sizes = [8, 8], strides = [1, 1]} : vector<8x32xf32> to vector<8x8xf32>
    %cst_53 = arith.constant dense<0.000000e+00> : vector<64x8xf32>
    %180 = tpu.matmul %178, %179, %cst_53 {dimension_numbers = #tpu.dot_dimension_numbers<[1], [0], [0], [1], [0, 0, 1, 1], [], []>} : vector<64x8xf32>, vector<8x8xf32>, vector<64x8xf32> -> vector<64x8xf32>
    %181 = vector.shape_cast %180 : vector<64x8xf32> to vector<8x8x8xf32>
    %182 = vector.extract_strided_slice %60 {offsets = [0, 24], sizes = [8, 8], strides = [1, 1]} : vector<8x32xf32> to vector<8x8xf32>
    %183 = vector.shape_cast %182 : vector<8x8xf32> to vector<1x8x8xf32>
    %184 = vector.broadcast %176 : vector<8x8x1xf32> to vector<8x8x8xf32>
    %185 = vector.broadcast %183 : vector<1x8x8xf32> to vector<8x8x8xf32>
    %186 = arith.mulf %184, %185 : vector<8x8x8xf32>
    %187 = arith.subf %181, %186 : vector<8x8x8xf32>
    %188 = vector.broadcast %177 : vector<8x8x1xf32> to vector<8x8x8xf32>
    %189 = arith.mulf %187, %188 : vector<8x8x8xf32>
    %190 = tpu.concatenate %93, %125, %157, %189 in 2 : vector<8x8x8xf32>, vector<8x8x8xf32>, vector<8x8x8xf32>, vector<8x8x8xf32> -> vector<8x8x32xf32>
    %191 = vector.shape_cast %190 : vector<8x8x32xf32> to vector<64x32xf32>
    %cst_54 = arith.constant dense<0.000000e+00> : vector<64x32xf32>
    %192 = tpu.matmul %191, %20, %cst_54 {dimension_numbers = #tpu.dot_dimension_numbers<[1], [0], [0], [1], [0, 0, 1, 1], [], []>} : vector<64x32xf32>, vector<32x32xf32>, vector<64x32xf32> -> vector<64x32xf32>
    %193 = vector.broadcast %5 : vector<1x32xf32> to vector<64x32xf32>
    %194 = arith.addf %192, %193 : vector<64x32xf32>
    %195 = vector.shape_cast %194 : vector<64x32xf32> to vector<8x8x32xf32>
    %196 = vector.shape_cast %31 : vector<8x32xf32> to vector<8x1x32xf32>
    %197 = vector.broadcast %196 : vector<8x1x32xf32> to vector<8x8x32xf32>
    %198 = arith.addf %195, %197 : vector<8x8x32xf32>
    %199 = vector.shape_cast %198 : vector<8x8x32xf32> to vector<64x32xf32>
    %cst_55 = arith.constant dense<0.000000e+00> : vector<64xf32>
    %200 = vector.multi_reduction <add>, %199, %cst_55 [1] : vector<64x32xf32> to vector<64xf32>
    %201 = vector.shape_cast %200 : vector<64xf32> to vector<64x1xf32>
    %cst_56 = arith.constant 3.200000e+01 : f32
    %202 = vector.broadcast %cst_56 : f32 to vector<64x1xf32>
    %203 = arith.divf %201, %202 : vector<64x1xf32>
    %204 = vector.broadcast %203 : vector<64x1xf32> to vector<64x32xf32>
    %205 = arith.subf %199, %204 : vector<64x32xf32>
    %206 = arith.mulf %205, %205 : vector<64x32xf32>
    %cst_57 = arith.constant dense<0.000000e+00> : vector<64xf32>
    %207 = vector.multi_reduction <add>, %206, %cst_57 [1] : vector<64x32xf32> to vector<64xf32>
    %208 = vector.shape_cast %207 : vector<64xf32> to vector<64x1xf32>
    %cst_58 = arith.constant 3.200000e+01 : f32
    %209 = vector.broadcast %cst_58 : f32 to vector<64x1xf32>
    %210 = arith.divf %208, %209 : vector<64x1xf32>
    %211 = vector.broadcast %203 : vector<64x1xf32> to vector<64x32xf32>
    %212 = arith.subf %199, %211 : vector<64x32xf32>
    %cst_59 = arith.constant 9.99999974E-6 : f32
    %213 = vector.broadcast %cst_59 : f32 to vector<64x1xf32>
    %214 = arith.addf %210, %213 : vector<64x1xf32>
    %215 = math.rsqrt %214 : vector<64x1xf32>
    %216 = vector.broadcast %215 : vector<64x1xf32> to vector<64x32xf32>
    %217 = arith.mulf %212, %216 : vector<64x32xf32>
    %218 = vector.broadcast %8 : vector<1x32xf32> to vector<64x32xf32>
    %219 = arith.mulf %217, %218 : vector<64x32xf32>
    %220 = vector.broadcast %9 : vector<1x32xf32> to vector<64x32xf32>
    %221 = arith.addf %219, %220 : vector<64x32xf32>
    %cst_60 = arith.constant dense<0.000000e+00> : vector<64x32xf32>
    %222 = tpu.matmul %221, %22, %cst_60 {dimension_numbers = #tpu.dot_dimension_numbers<[1], [0], [0], [1], [0, 0, 1, 1], [], []>} : vector<64x32xf32>, vector<32x32xf32>, vector<64x32xf32> -> vector<64x32xf32>
    %223 = vector.broadcast %6 : vector<1x32xf32> to vector<64x32xf32>
    %224 = arith.addf %222, %223 : vector<64x32xf32>
    %cst_61 = arith.constant 0.000000e+00 : f32
    %225 = vector.broadcast %cst_61 : f32 to vector<64x32xf32>
    %226 = arith.cmpf oge, %224, %225 : vector<64x32xf32>
    %cst_62 = arith.constant 0.00999999977 : f32
    %227 = vector.broadcast %cst_62 : f32 to vector<64x32xf32>
    %228 = arith.mulf %227, %224 : vector<64x32xf32>
    %229 = arith.select %226, %224, %228 : vector<64x32xi1>, vector<64x32xf32>
    %cst_63 = arith.constant dense<0.000000e+00> : vector<64x32xf32>
    %230 = tpu.matmul %229, %24, %cst_63 {dimension_numbers = #tpu.dot_dimension_numbers<[1], [0], [0], [1], [0, 0, 1, 1], [], []>} : vector<64x32xf32>, vector<32x32xf32>, vector<64x32xf32> -> vector<64x32xf32>
    %231 = vector.broadcast %7 : vector<1x32xf32> to vector<64x32xf32>
    %232 = arith.addf %230, %231 : vector<64x32xf32>
    %cst_64 = arith.constant dense<0.000000e+00> : vector<64xf32>
    %233 = vector.multi_reduction <add>, %232, %cst_64 [1] : vector<64x32xf32> to vector<64xf32>
    %234 = vector.shape_cast %233 : vector<64xf32> to vector<64x1xf32>
    %cst_65 = arith.constant 3.200000e+01 : f32
    %235 = vector.broadcast %cst_65 : f32 to vector<64x1xf32>
    %236 = arith.divf %234, %235 : vector<64x1xf32>
    %237 = vector.broadcast %236 : vector<64x1xf32> to vector<64x32xf32>
    %238 = arith.subf %232, %237 : vector<64x32xf32>
    %239 = arith.mulf %238, %238 : vector<64x32xf32>
    %cst_66 = arith.constant dense<0.000000e+00> : vector<64xf32>
    %240 = vector.multi_reduction <add>, %239, %cst_66 [1] : vector<64x32xf32> to vector<64xf32>
    %241 = vector.shape_cast %240 : vector<64xf32> to vector<64x1xf32>
    %cst_67 = arith.constant 3.200000e+01 : f32
    %242 = vector.broadcast %cst_67 : f32 to vector<64x1xf32>
    %243 = arith.divf %241, %242 : vector<64x1xf32>
    %244 = vector.broadcast %236 : vector<64x1xf32> to vector<64x32xf32>
    %245 = arith.subf %232, %244 : vector<64x32xf32>
    %cst_68 = arith.constant 9.99999974E-6 : f32
    %246 = vector.broadcast %cst_68 : f32 to vector<64x1xf32>
    %247 = arith.addf %243, %246 : vector<64x1xf32>
    %248 = math.rsqrt %247 : vector<64x1xf32>
    %249 = vector.broadcast %248 : vector<64x1xf32> to vector<64x32xf32>
    %250 = arith.mulf %245, %249 : vector<64x32xf32>
    %251 = vector.broadcast %10 : vector<1x32xf32> to vector<64x32xf32>
    %252 = arith.mulf %250, %251 : vector<64x32xf32>
    %253 = vector.broadcast %11 : vector<1x32xf32> to vector<64x32xf32>
    %254 = arith.addf %252, %253 : vector<64x32xf32>
    %255 = vector.shape_cast %254 : vector<64x32xf32> to vector<8x8x32xf32>
    %256 = vector.extract_strided_slice %255 {offsets = [0, 0, 0], sizes = [1, 8, 32], strides = [1, 1, 1]} : vector<8x8x32xf32> to vector<1x8x32xf32>
    %257 = vector.shape_cast %256 : vector<1x8x32xf32> to vector<8x32xf32>
    %258 = vector.extract_strided_slice %255 {offsets = [1, 0, 0], sizes = [1, 8, 32], strides = [1, 1, 1]} : vector<8x8x32xf32> to vector<1x8x32xf32>
    %259 = vector.shape_cast %258 : vector<1x8x32xf32> to vector<8x32xf32>
    %260 = vector.extract_strided_slice %255 {offsets = [2, 0, 0], sizes = [1, 8, 32], strides = [1, 1, 1]} : vector<8x8x32xf32> to vector<1x8x32xf32>
    %261 = vector.shape_cast %260 : vector<1x8x32xf32> to vector<8x32xf32>
    %262 = vector.extract_strided_slice %255 {offsets = [3, 0, 0], sizes = [1, 8, 32], strides = [1, 1, 1]} : vector<8x8x32xf32> to vector<1x8x32xf32>
    %263 = vector.shape_cast %262 : vector<1x8x32xf32> to vector<8x32xf32>
    %264 = vector.extract_strided_slice %255 {offsets = [4, 0, 0], sizes = [1, 8, 32], strides = [1, 1, 1]} : vector<8x8x32xf32> to vector<1x8x32xf32>
    %265 = vector.shape_cast %264 : vector<1x8x32xf32> to vector<8x32xf32>
    %266 = vector.extract_strided_slice %255 {offsets = [5, 0, 0], sizes = [1, 8, 32], strides = [1, 1, 1]} : vector<8x8x32xf32> to vector<1x8x32xf32>
    %267 = vector.shape_cast %266 : vector<1x8x32xf32> to vector<8x32xf32>
    %268 = vector.extract_strided_slice %255 {offsets = [6, 0, 0], sizes = [1, 8, 32], strides = [1, 1, 1]} : vector<8x8x32xf32> to vector<1x8x32xf32>
    %269 = vector.shape_cast %268 : vector<1x8x32xf32> to vector<8x32xf32>
    %270 = vector.extract_strided_slice %255 {offsets = [7, 0, 0], sizes = [1, 8, 32], strides = [1, 1, 1]} : vector<8x8x32xf32> to vector<1x8x32xf32>
    %271 = vector.shape_cast %270 : vector<1x8x32xf32> to vector<8x32xf32>
    %272 = tpu.concatenate %257, %259, %261, %263, %265, %267, %269, %271, %31, %38, %47, %56 in 1 : vector<8x32xf32>, vector<8x32xf32>, vector<8x32xf32>, vector<8x32xf32>, vector<8x32xf32>, vector<8x32xf32>, vector<8x32xf32>, vector<8x32xf32>, vector<8x32xf32>, vector<8x32xf32>, vector<8x32xf32>, vector<8x32xf32> -> vector<8x384xf32>
    %c0_69 = arith.constant 0 : index
    %c0_70 = arith.constant 0 : index
    %273 = vector.load %arg7[%c0_69, %c0_70] : memref<8x384xf32, #tpu.memory_space<vmem>>, vector<8x384xf32>
    tpu.vector_store %arg7[%c0_69, %c0_70], %272 {strides = array<i32>} : memref<8x384xf32, #tpu.memory_space<vmem>>, vector<8x384xf32>,
    return
  }
}

</mosaic_0001>

<llo_original>
// kernel: ceda_forward.1
$region0: #{ceda_forward.1}
  #allocation0 [shape = 'u32[]', space=smem, size = 0x4, offset = 0x4, fixed_abs, tag = 'smem constant byte address 0x4 - core index']
  #allocation1 [shape = 'u32[72,128]{1,0:T(1,128)}', space=vmem, size = 0x9000, scoped, tag = 'internal scratch']
  %s0 = inlined_call_operand.vmem [shape: f32[8,8], index: 0, kind: input, shape index: {}]
  %s1 = inlined_call_operand.vmem [shape: f32[8,32], index: 1, kind: input, shape index: {}]
  %s2 = inlined_call_operand.vmem [shape: f32[8,32], index: 2, kind: input, shape index: {}]
  %s3 = inlined_call_operand.vmem [shape: f32[40,32], index: 3, kind: input, shape index: {}]
  %s4 = inlined_call_operand.vmem [shape: f32[32,128], index: 4, kind: input, shape index: {}]
  %s5 = inlined_call_operand.hbm [shape: f32[6,32,32], index: 5, kind: input, shape index: {}]
  %s6 = inlined_call_operand.vmem [shape: f32[4,128], index: 6, kind: input, shape index: {}]
  %s7 = inlined_call_operand.vmem [shape: f32[8,384], index: 7, kind: output, shape index: {}]
  %s8 = sld [smem:[#allocation0]]
  $region42: #{ceda_forward.1} parent=0
    _
  %s10 = ssub.s32 1, %s8
  %s11 = scalar_select 0, %s10, %s8
  $region1: #{ceda_forward.1} parent=0
    #allocation2 [shape = 'u8[98304]{0}', space=vmem, size = 0x18000, scoped, tag = 'input window, operand 5, single buffered']
    #allocation3 [shape = 's32[1]{0}', space=sflag, size = 0x4, scoped, tag = 'scoped memory for ceda_forward.1']
    %12 = vsyncpa [#allocation3], 0
    // Predicated region
    $region2: #{ceda_forward.1} parent=1 // pred_check
      _
    $region3: #{ceda_forward.1} parent=1 // pred_check_branch
      %14 = sbr.rel (0) target = $region5
    $region4: #{ceda_forward.1} parent=1 // pred_region
      _
    $region5: #{ceda_forward.1} parent=1 // pred_fallthru
      _
    // Predicated region
    $region6: #{ceda_forward.1} parent=1 // pred_check
      _
    $region7: #{ceda_forward.1} parent=1 // pred_check_branch
      %16 = sbr.rel (0) target = $region9
    $region8: #{ceda_forward.1} parent=1 // pred_region
      _
    $region9: #{ceda_forward.1} parent=1 // pred_fallthru
      _
    // Predicated region
    $region10: #{ceda_forward.1} parent=1 // pred_check
      _
    $region11: #{ceda_forward.1} parent=1 // pred_check_branch
      %18 = sbr.rel (0) target = $region13
    $region12: #{ceda_forward.1} parent=1 // pred_region
      _
    $region13: #{ceda_forward.1} parent=1 // pred_fallthru
      _
    // Predicated region
    $region14: #{ceda_forward.1} parent=1 // pred_check
      _
    $region15: #{ceda_forward.1} parent=1 // pred_check_branch
      %20 = sbr.rel (0) target = $region17
    $region16: #{ceda_forward.1} parent=1 // pred_region
      _
    $region17: #{ceda_forward.1} parent=1 // pred_fallthru
      _
    // Predicated region
    $region18: #{ceda_forward.1} parent=1 // pred_check
      _
    $region19: #{ceda_forward.1} parent=1 // pred_check_branch
      %22 = sbr.rel (0) target = $region21
    $region20: #{ceda_forward.1} parent=1 // pred_region
      _
    $region21: #{ceda_forward.1} parent=1 // pred_fallthru
      _
    // Predicated region
    $region22: #{ceda_forward.1} parent=1 // pred_check
      _
    $region23: #{ceda_forward.1} parent=1 // pred_check_branch
      %24 = sbr.rel (0) target = $region25
    $region24: #{ceda_forward.1} parent=1 // pred_region
      %26 = vsyncadd [#allocation3], 0
      %s27 = sshll.u32 %s5, 4
      %s28 = int_to_ptr.hbm [resolvable:$true] %s27
      %s29 = sshll.u32 [#allocation2], 4
      %s30 = int_to_ptr.vmem [resolvable:$true] %s29
      %35 = dma.hbm_to_vmem [thread:$0]  %s28, 3072, %s30, [#allocation3], 128, 128, 8
    $region25: #{ceda_forward.1} parent=1 // pred_fallthru
      _
    // Predicated region
    $region26: #{ceda_forward.1} parent=1 // pred_check
      _
    $region27: #{ceda_forward.1} parent=1 // pred_check_branch
      %37 = sbr.rel (0) target = $region29
    $region28: #{ceda_forward.1} parent=1 // pred_region
      _
    $region29: #{ceda_forward.1} parent=1 // pred_fallthru
      _
    // Predicated region
    $region30: #{ceda_forward.1} parent=1 // pred_check
      _
    $region31: #{ceda_forward.1} parent=1 // pred_check_branch
      %39 = sbr.rel (0) target = $region33
    $region32: #{ceda_forward.1} parent=1 // pred_region
      %41 = dma.done [#allocation3], 3072
    $region33: #{ceda_forward.1} parent=1 // pred_fallthru
      _
    %v42 = vld [vmem:[%s6] sm:$0xf]
    %v43 = vld [vmem:[#allocation2] sm:$0xff]
    %v44 = vld [vmem:[#allocation2 + $0x8] sm:$0xff]
    %v45 = vld [vmem:[#allocation2 + $0x10] sm:$0xff]
    %v46 = vld [vmem:[#allocation2 + $0x18] sm:$0xff]
    %s47 = scalar_lea.vmem [#allocation2], 32
    %v48 = vld [vmem:[%s47] sm:$0xff]
    %v49 = vld [vmem:[%s47 + $0x8] sm:$0xff]
    %v50 = vld [vmem:[%s47 + $0x10] sm:$0xff]
    %v51 = vld [vmem:[%s47 + $0x18] sm:$0xff]
    %s52 = scalar_lea.vmem [#allocation2], 64
    %v53 = vld [vmem:[%s52] sm:$0xff]
    %v54 = vld [vmem:[%s52 + $0x8] sm:$0xff]
    %v55 = vld [vmem:[%s52 + $0x10] sm:$0xff]
    %v56 = vld [vmem:[%s52 + $0x18] sm:$0xff]
    %s57 = scalar_lea.vmem [#allocation2], 96
    %v58 = vld [vmem:[%s57] sm:$0xff]
    %v59 = vld [vmem:[%s57 + $0x8] sm:$0xff]
    %v60 = vld [vmem:[%s57 + $0x10] sm:$0xff]
    %v61 = vld [vmem:[%s57 + $0x18] sm:$0xff]
    %s62 = scalar_lea.vmem [#allocation2], 128
    %v63 = vld [vmem:[%s62] sm:$0xff]
    %v64 = vld [vmem:[%s62 + $0x8] sm:$0xff]
    %v65 = vld [vmem:[%s62 + $0x10] sm:$0xff]
    %v66 = vld [vmem:[%s62 + $0x18] sm:$0xff]
    %s67 = scalar_lea.vmem [#allocation2], 160
    %v68 = vld [vmem:[%s67] sm:$0xff]
    %v69 = vld [vmem:[%s67 + $0x8] sm:$0xff]
    %v70 = vld [vmem:[%s67 + $0x10] sm:$0xff]
    %v71 = vld [vmem:[%s67 + $0x18] sm:$0xff]
    %v72 = vld [vmem:[%s0] sm:$0xff]
    %v73 = vld [vmem:[%s1] sm:$0xff]
    %75 = vrot.lane.b32.xlu0 %v73, 8
    %v76 = vpop.permute.xlu0 %75
    %vm78 = vcmask 64512
    %v79 = vsel %vm78, %v72, %v76
    %v80 = vld [vmem:[%s3] sm:$0xff]
    %v81 = vld [vmem:[%s3 + $0x8] sm:$0xff]
    %v82 = vld [vmem:[%s3 + $0x10] sm:$0xff]
    %v83 = vld [vmem:[%s3 + $0x18] sm:$0xff]
    %v84 = vld [vmem:[%s3 + $0x20] sm:$0xff]
    %v85 = vperm.slane %v42, 0
    %vm86 = vcmask 326656
    %v88 = vsel %vm86, %v79, 0
    %90 = vmatpush.msra.mxu0 0.0
    %91 = vmatpush.msra.mxu0 0.0
    %92 = vmatpush.msra.mxu0 0.0
    %93 = vmatpush.msra.mxu0 0.0
    %94 = vmatpush.msra.mxu0 0.0
    %95 = vmatpush.msra.mxu0 0.0
    %96 = vmatpush.msra.mxu0 0.0
    %97 = vmatpush.msra.mxu0 0.0
    %98 = vmatpush.msra.mxu0 0.0
    %99 = vmatpush.msra.mxu0 0.0
    %100 = vmatpush.msra.mxu0 0.0
    %101 = vmatpush.msra.mxu0 %v84
    %102 = vmatpush.msra.mxu0 %v83
    %103 = vmatpush.msra.mxu0 %v82
    %104 = vmatpush.msra.mxu0 %v81
    %105 = vmatpush.msra.mxu0 %v80
    %106 = vmatmul.f32.gmra.mxu0 %v88
    %v107 = vpop.f32.mrf.mxu0
    %v108 = vadd.f32 %v85, %v107
    %109 = vdwg.mxu0
    %v110 = vld [vmem:[%s4] sm:$0xff]
    %v111 = vld [vmem:[%s4 + $0x8] sm:$0xff]
    %v112 = vld [vmem:[%s4 + $0x10] sm:$0xff]
    %v113 = vld [vmem:[%s4 + $0x18] sm:$0xff]
    %v114 = vperm.slane %v42, 3
    %vm115 = vcmask 261120
    %v117 = vsel %vm115, %v108, 0
    %119 = vmatpush.msra.mxu0 0.0
    %120 = vmatpush.msra.mxu0 0.0
    %121 = vmatpush.msra.mxu0 0.0
    %122 = vmatpush.msra.mxu0 0.0
    %123 = vmatpush.msra.mxu0 0.0
    %124 = vmatpush.msra.mxu0 0.0
    %125 = vmatpush.msra.mxu0 0.0
    %126 = vmatpush.msra.mxu0 0.0
    %127 = vmatpush.msra.mxu0 0.0
    %128 = vmatpush.msra.mxu0 0.0
    %129 = vmatpush.msra.mxu0 0.0
    %130 = vmatpush.msra.mxu0 0.0
    %131 = vmatpush.msra.mxu0 %v113
    %132 = vmatpush.msra.mxu0 %v112
    %133 = vmatpush.msra.mxu0 %v111
    %134 = vmatpush.msra.mxu0 %v110
    %135 = vmatmul.f32.gmra.mxu0 %v117
    %v136 = vpop.f32.mrf.mxu0
    %v137 = vadd.f32 %v114, %v136
    %138 = vdwg.mxu0
    %v139 = vmax.f32 %v137, 0.0
    %v140 = vld [vmem:[%s2] sm:$0xff]
    %142 = vrot.lane.b32.xlu0 %v85, 96
    %v143 = vpop.permute.xlu0 %142
    %v146 = vsel %vm115, %v140, 0
    %148 = vmatpush.msra.mxu0 0.0
    %149 = vmatpush.msra.mxu0 0.0
    %150 = vmatpush.msra.mxu0 0.0
    %151 = vmatpush.msra.mxu0 0.0
    %152 = vmatpush.msra.mxu0 0.0
    %153 = vmatpush.msra.mxu0 0.0
    %154 = vmatpush.msra.mxu0 0.0
    %155 = vmatpush.msra.mxu0 0.0
    %156 = vmatpush.msra.mxu0 0.0
    %157 = vmatpush.msra.mxu0 0.0
    %158 = vmatpush.msra.mxu0 0.0
    %159 = vmatpush.msra.mxu0 0.0
    %160 = vmatpush.msra.mxu0 %v46
    %161 = vmatpush.msra.mxu0 %v45
    %162 = vmatpush.msra.mxu0 %v44
    %163 = vmatpush.msra.mxu0 %v43
    %164 = vmatmul.f32.gmra.mxu0 %v146
    %v165 = vpop.f32.mrf.mxu0
    %v166 = vadd.f32 %v143, %v165
    %167 = vdwg.mxu0
    %v168 = vmax.f32 %v166, 0.0
    %v169 = vsub.f32 %v139, %v168
    %170 = vrot.lane.b32.xlu0 %v85, 64
    %v171 = vpop.permute.xlu0 %170
    %v174 = vsel %vm115, %v169, 0
    %176 = vmatpush.msra.mxu0 0.0
    %177 = vmatpush.msra.mxu0 0.0
    %178 = vmatpush.msra.mxu0 0.0
    %179 = vmatpush.msra.mxu0 0.0
    %180 = vmatpush.msra.mxu0 0.0
    %181 = vmatpush.msra.mxu0 0.0
    %182 = vmatpush.msra.mxu0 0.0
    %183 = vmatpush.msra.mxu0 0.0
    %184 = vmatpush.msra.mxu0 0.0
    %185 = vmatpush.msra.mxu0 0.0
    %186 = vmatpush.msra.mxu0 0.0
    %187 = vmatpush.msra.mxu0 0.0
    %188 = vmatpush.msra.mxu0 %v51
    %189 = vmatpush.msra.mxu0 %v50
    %190 = vmatpush.msra.mxu0 %v49
    %191 = vmatpush.msra.mxu0 %v48
    %192 = vmatmul.f32.gmra.mxu0 %v174
    %v193 = vpop.f32.mrf.mxu0
    %v194 = vadd.f32 %v171, %v193
    %195 = vdwg.mxu0
    %v196 = vmax.f32 %v194, 0.0
    %197 = vrot.lane.b32.xlu0 %v85, 32
    %v198 = vpop.permute.xlu0 %197
    %v201 = vsel %vm115, %v196, 0
    %203 = vmatpush.msra.mxu0 0.0
    %204 = vmatpush.msra.mxu0 0.0
    %205 = vmatpush.msra.mxu0 0.0
    %206 = vmatpush.msra.mxu0 0.0
    %207 = vmatpush.msra.mxu0 0.0
    %208 = vmatpush.msra.mxu0 0.0
    %209 = vmatpush.msra.mxu0 0.0
    %210 = vmatpush.msra.mxu0 0.0
    %211 = vmatpush.msra.mxu0 0.0
    %212 = vmatpush.msra.mxu0 0.0
    %213 = vmatpush.msra.mxu0 0.0
    %214 = vmatpush.msra.mxu0 0.0
    %215 = vmatpush.msra.mxu0 %v56
    %216 = vmatpush.msra.mxu0 %v55
    %217 = vmatpush.msra.mxu0 %v54
    %218 = vmatpush.msra.mxu0 %v53
    %219 = vmatmul.f32.gmra.mxu0 %v201
    %v220 = vpop.f32.mrf.mxu0
    %v221 = vadd.f32 %v198, %v220
    %222 = vdwg.mxu0
    %v224 = vsel %vm115, %v221, 0
    %226 = vmatpush.msra.mxu0 0.0
    %227 = vmatpush.msra.mxu0 0.0
    %228 = vmatpush.msra.mxu0 0.0
    %229 = vmatpush.msra.mxu0 0.0
    %230 = vmatpush.msra.mxu0 0.0
    %231 = vmatpush.msra.mxu0 0.0
    %232 = vmatpush.msra.mxu0 0.0
    %233 = vmatpush.msra.mxu0 0.0
    %234 = vmatpush.msra.mxu0 0.0
    %235 = vmatpush.msra.mxu0 0.0
    %236 = vmatpush.msra.mxu0 0.0
    %237 = vmatpush.msra.mxu0 0.0
    %238 = vmatpush.msra.mxu0 %v113
    %239 = vmatpush.msra.mxu0 %v112
    %240 = vmatpush.msra.mxu0 %v111
    %241 = vmatpush.msra.mxu0 %v110
    %242 = vmatmul.f32.gmra.mxu0 %v224
    %v243 = vpop.f32.mrf.mxu0
    %v244 = vadd.f32 0.0, %v243
    %245 = vdwg.mxu0
    %248 = vrot.lane.b32.xlu0 %v137, 96
    %v249 = vpop.permute.xlu0 %248
    %250 = vrot.lane.b32.xlu0 %v244, 96
    %v251 = vpop.permute.xlu0 %250
    %252 = vrot.lane.b32.xlu0 %v137, 64
    %v253 = vpop.permute.xlu0 %252
    %v254 = vsel %vm78, %v249, 0
    %v256 = vsel %vm78, %v251, 0
    %v258 = vsel %vm78, %v253, 0
    %260 = vmatpush.xpose.msra.mxu0 0.0
    %261 = vmatpush.xpose.msra.mxu0 0.0
    %262 = vmatpush.xpose.msra.mxu0 0.0
    %263 = vmatpush.xpose.msra.mxu0 0.0
    %264 = vmatpush.xpose.msra.mxu0 0.0
    %265 = vmatpush.xpose.msra.mxu0 0.0
    %266 = vmatpush.xpose.msra.mxu0 0.0
    %267 = vmatpush.xpose.msra.mxu0 0.0
    %268 = vmatpush.xpose.msra.mxu0 0.0
    %269 = vmatpush.xpose.msra.mxu0 0.0
    %270 = vmatpush.xpose.msra.mxu0 0.0
    %271 = vmatpush.xpose.msra.mxu0 0.0
    %272 = vmatpush.xpose.msra.mxu0 0.0
    %273 = vmatpush.xpose.msra.mxu0 0.0
    %274 = vmatpush.xpose.msra.mxu0 0.0
    %275 = vmatpush.xpose.msra.mxu0 %v258
    %276 = vmatmul.f32.gmra.mxu0 %v254
    %v277 = vpop.f32.mrf.mxu0
    %v278 = vadd.f32 0.0, %v277
    %279 = vmatmul.f32.gmra.mxu0 %v256
    %v280 = vpop.f32.mrf.mxu0
    %v281 = vadd.f32 0.0, %v280
    %282 = vdwg.mxu0
    %v283 = vmul.f32 %v278, 0.35355338
    %v284 = vmul.f32 %v281, 0.35355338
    %v286 = vrot.slane %v283, 1
    %v287 = vrot.slane %v283, 2
    %v288 = vrot.slane %v283, 3
    %v289 = vrot.slane %v283, 4
    %v290 = vrot.slane %v283, 5
    %v291 = vrot.slane %v283, 6
    %v292 = vrot.slane %v283, 7
    %v293 = vperm.slane %v283, 0
    %v294 = vperm.slane %v286, 0
    %v295 = vperm.slane %v287, 0
    %v296 = vperm.slane %v288, 0
    %v297 = vperm.slane %v289, 0
    %v298 = vperm.slane %v290, 0
    %v299 = vperm.slane %v291, 0
    %v300 = vperm.slane %v292, 0
    %v309 = vsub.f32 %v293, %v284
    %v310 = vsub.f32 %v294, %v284
    %v311 = vsub.f32 %v295, %v284
    %v312 = vsub.f32 %v296, %v284
    %v313 = vsub.f32 %v297, %v284
    %v314 = vsub.f32 %v298, %v284
    %v315 = vsub.f32 %v299, %v284
    %v316 = vsub.f32 %v300, %v284
    %v317 = vsel %vm78, %v309, -inf
    %318 = vmax.xlane.f32.xlu0 %v317
    %v319 = vpop.xlane.xlu0 %318
    %v320 = vsel %vm78, %v310, -inf
    %321 = vmax.xlane.f32.xlu0 %v320
    %v322 = vpop.xlane.xlu0 %321
    %v323 = vsel %vm78, %v311, -inf
    %324 = vmax.xlane.f32.xlu0 %v323
    %v325 = vpop.xlane.xlu0 %324
    %v326 = vsel %vm78, %v312, -inf
    %327 = vmax.xlane.f32.xlu0 %v326
    %v328 = vpop.xlane.xlu0 %327
    %v329 = vsel %vm78, %v313, -inf
    %330 = vmax.xlane.f32.xlu0 %v329
    %v331 = vpop.xlane.xlu0 %330
    %v332 = vsel %vm78, %v314, -inf
    %333 = vmax.xlane.f32.xlu0 %v332
    %v334 = vpop.xlane.xlu0 %333
    %v335 = vsel %vm78, %v315, -inf
    %336 = vmax.xlane.f32.xlu0 %v335
    %v337 = vpop.xlane.xlu0 %336
    %v338 = vsel %vm78, %v316, -inf
    %339 = vmax.xlane.f32.xlu0 %v338
    %v340 = vpop.xlane.xlu0 %339
    %v341 = vsub.f32 %v309, %v319
    %v342 = vsub.f32 %v310, %v322
    %v343 = vsub.f32 %v311, %v325
    %v344 = vsub.f32 %v312, %v328
    %v345 = vsub.f32 %v313, %v331
    %v346 = vsub.f32 %v314, %v334
    %v347 = vsub.f32 %v315, %v337
    %v348 = vsub.f32 %v316, %v340
    %v349 = vmul.f32 %v341, 1.442695
    %v350 = vpow.pop %v349
    %v351 = vmul.f32 %v342, 1.442695
    %v352 = vpow.pop %v351
    %v353 = vmul.f32 %v343, 1.442695
    %v354 = vpow.pop %v353
    %v355 = vmul.f32 %v344, 1.442695
    %v356 = vpow.pop %v355
    %v357 = vmul.f32 %v345, 1.442695
    %v358 = vpow.pop %v357
    %v359 = vmul.f32 %v346, 1.442695
    %v360 = vpow.pop %v359
    %v361 = vmul.f32 %v347, 1.442695
    %v362 = vpow.pop %v361
    %v363 = vmul.f32 %v348, 1.442695
    %v364 = vpow.pop %v363
    %v365 = vsel %vm78, %v350, 0.0
    %366 = vadd.xlane.f32.xlu0 %v365
    %v367 = vpop.xlane.xlu0 %366
    %v368 = vsel %vm78, %v352, 0.0
    %369 = vadd.xlane.f32.xlu0 %v368
    %v370 = vpop.xlane.xlu0 %369
    %v371 = vsel %vm78, %v354, 0.0
    %372 = vadd.xlane.f32.xlu0 %v371
    %v373 = vpop.xlane.xlu0 %372
    %v374 = vsel %vm78, %v356, 0.0
    %375 = vadd.xlane.f32.xlu0 %v374
    %v376 = vpop.xlane.xlu0 %375
    %v377 = vsel %vm78, %v358, 0.0
    %378 = vadd.xlane.f32.xlu0 %v377
    %v379 = vpop.xlane.xlu0 %378
    %v380 = vsel %vm78, %v360, 0.0
    %381 = vadd.xlane.f32.xlu0 %v380
    %v382 = vpop.xlane.xlu0 %381
    %v383 = vsel %vm78, %v362, 0.0
    %384 = vadd.xlane.f32.xlu0 %v383
    %v385 = vpop.xlane.xlu0 %384
    %v386 = vsel %vm78, %v364, 0.0
    %387 = vadd.xlane.f32.xlu0 %v386
    %v388 = vpop.xlane.xlu0 %387
    %v389 = vrcp.pop %v367
    %v390 = vrcp.pop %v370
    %v391 = vrcp.pop %v373
    %v392 = vrcp.pop %v376
    %v393 = vrcp.pop %v379
    %v394 = vrcp.pop %v382
    %v395 = vrcp.pop %v385
    %v396 = vrcp.pop %v388
    %397 = vrot.lane.b32.xlu0 %v137, 32
    %v398 = vpop.permute.xlu0 %397
    %v401 = vsel %vm78, %v350, 0
    %v404 = vsel %vm78, %v352, 0
    %v407 = vsel %vm78, %v354, 0
    %v410 = vsel %vm78, %v356, 0
    %v413 = vsel %vm78, %v358, 0
    %v416 = vsel %vm78, %v360, 0
    %v419 = vsel %vm78, %v362, 0
    %v422 = vsel %vm78, %v364, 0
    %424 = vmatpush.msra.mxu0 0.0
    %425 = vmatpush.msra.mxu0 0.0
    %426 = vmatpush.msra.mxu0 0.0
    %427 = vmatpush.msra.mxu0 0.0
    %428 = vmatpush.msra.mxu0 0.0
    %429 = vmatpush.msra.mxu0 0.0
    %430 = vmatpush.msra.mxu0 0.0
    %431 = vmatpush.msra.mxu0 0.0
    %432 = vmatpush.msra.mxu0 0.0
    %433 = vmatpush.msra.mxu0 0.0
    %434 = vmatpush.msra.mxu0 0.0
    %435 = vmatpush.msra.mxu0 0.0
    %436 = vmatpush.msra.mxu0 0.0
    %437 = vmatpush.msra.mxu0 0.0
    %438 = vmatpush.msra.mxu0 0.0
    %439 = vmatpush.msra.mxu0 %v398
    %440 = vmatmul.f32.gmra.mxu0 %v401
    %v441 = vpop.f32.mrf.mxu0
    %v442 = vadd.f32 0.0, %v441
    %443 = vmatmul.f32.gmra.mxu0 %v404
    %v444 = vpop.f32.mrf.mxu0
    %v445 = vadd.f32 0.0, %v444
    %446 = vmatmul.f32.gmra.mxu0 %v407
    %v447 = vpop.f32.mrf.mxu0
    %v448 = vadd.f32 0.0, %v447
    %449 = vmatmul.f32.gmra.mxu0 %v410
    %v450 = vpop.f32.mrf.mxu0
    %v451 = vadd.f32 0.0, %v450
    %452 = vmatmul.f32.gmra.mxu0 %v413
    %v453 = vpop.f32.mrf.mxu0
    %v454 = vadd.f32 0.0, %v453
    %455 = vmatmul.f32.gmra.mxu0 %v416
    %v456 = vpop.f32.mrf.mxu0
    %v457 = vadd.f32 0.0, %v456
    %458 = vmatmul.f32.gmra.mxu0 %v419
    %v459 = vpop.f32.mrf.mxu0
    %v460 = vadd.f32 0.0, %v459
    %461 = vmatmul.f32.gmra.mxu0 %v422
    %v462 = vpop.f32.mrf.mxu0
    %v463 = vadd.f32 0.0, %v462
    %464 = vdwg.mxu0
    %v465 = vmul.f32 %v367, %v244
    %v466 = vmul.f32 %v370, %v244
    %v467 = vmul.f32 %v373, %v244
    %v468 = vmul.f32 %v376, %v244
    %v469 = vmul.f32 %v379, %v244
    %v470 = vmul.f32 %v382, %v244
    %v471 = vmul.f32 %v385, %v244
    %v472 = vmul.f32 %v388, %v244
    %481 = vrot.lane.b32.xlu0 %v465, 32
    %v482 = vpop.permute.xlu0 %481
    %483 = vrot.lane.b32.xlu0 %v466, 32
    %v484 = vpop.permute.xlu0 %483
    %485 = vrot.lane.b32.xlu0 %v467, 32
    %v486 = vpop.permute.xlu0 %485
    %487 = vrot.lane.b32.xlu0 %v468, 32
    %v488 = vpop.permute.xlu0 %487
    %489 = vrot.lane.b32.xlu0 %v469, 32
    %v490 = vpop.permute.xlu0 %489
    %491 = vrot.lane.b32.xlu0 %v470, 32
    %v492 = vpop.permute.xlu0 %491
    %493 = vrot.lane.b32.xlu0 %v471, 32
    %v494 = vpop.permute.xlu0 %493
    %495 = vrot.lane.b32.xlu0 %v472, 32
    %v496 = vpop.permute.xlu0 %495
    %v505 = vsub.f32 %v442, %v482
    %v506 = vsub.f32 %v445, %v484
    %v507 = vsub.f32 %v448, %v486
    %v508 = vsub.f32 %v451, %v488
    %v509 = vsub.f32 %v454, %v490
    %v510 = vsub.f32 %v457, %v492
    %v511 = vsub.f32 %v460, %v494
    %v512 = vsub.f32 %v463, %v496
    %v513 = vmul.f32 %v505, %v389
    %v514 = vmul.f32 %v506, %v390
    %v515 = vmul.f32 %v507, %v391
    %v516 = vmul.f32 %v508, %v392
    %v517 = vmul.f32 %v509, %v393
    %v518 = vmul.f32 %v510, %v394
    %v519 = vmul.f32 %v511, %v395
    %v520 = vmul.f32 %v512, %v396
    %521 = vrot.lane.b32.xlu0 %v137, 88
    %v522 = vpop.permute.xlu0 %521
    %523 = vrot.lane.b32.xlu0 %v244, 88
    %v524 = vpop.permute.xlu0 %523
    %525 = vrot.lane.b32.xlu0 %v137, 56
    %v526 = vpop.permute.xlu0 %525
    %v527 = vsel %vm78, %v522, 0
    %v529 = vsel %vm78, %v524, 0
    %v531 = vsel %vm78, %v526, 0
    %533 = vmatpush.xpose.msra.mxu0 0.0
    %534 = vmatpush.xpose.msra.mxu0 0.0
    %535 = vmatpush.xpose.msra.mxu0 0.0
    %536 = vmatpush.xpose.msra.mxu0 0.0
    %537 = vmatpush.xpose.msra.mxu0 0.0
    %538 = vmatpush.xpose.msra.mxu0 0.0
    %539 = vmatpush.xpose.msra.mxu0 0.0
    %540 = vmatpush.xpose.msra.mxu0 0.0
    %541 = vmatpush.xpose.msra.mxu0 0.0
    %542 = vmatpush.xpose.msra.mxu0 0.0
    %543 = vmatpush.xpose.msra.mxu0 0.0
    %544 = vmatpush.xpose.msra.mxu0 0.0
    %545 = vmatpush.xpose.msra.mxu0 0.0
    %546 = vmatpush.xpose.msra.mxu0 0.0
    %547 = vmatpush.xpose.msra.mxu0 0.0
    %548 = vmatpush.xpose.msra.mxu0 %v531
    %549 = vmatmul.f32.gmra.mxu0 %v527
    %v550 = vpop.f32.mrf.mxu0
    %v551 = vadd.f32 0.0, %v550
    %552 = vmatmul.f32.gmra.mxu0 %v529
    %v553 = vpop.f32.mrf.mxu0
    %v554 = vadd.f32 0.0, %v553
    %555 = vdwg.mxu0
    %v556 = vmul.f32 %v551, 0.35355338
    %v557 = vmul.f32 %v554, 0.35355338
    %v559 = vrot.slane %v556, 1
    %v560 = vrot.slane %v556, 2
    %v561 = vrot.slane %v556, 3
    %v562 = vrot.slane %v556, 4
    %v563 = vrot.slane %v556, 5
    %v564 = vrot.slane %v556, 6
    %v565 = vrot.slane %v556, 7
    %v566 = vperm.slane %v556, 0
    %v567 = vperm.slane %v559, 0
    %v568 = vperm.slane %v560, 0
    %v569 = vperm.slane %v561, 0
    %v570 = vperm.slane %v562, 0
    %v571 = vperm.slane %v563, 0
    %v572 = vperm.slane %v564, 0
    %v573 = vperm.slane %v565, 0
    %v582 = vsub.f32 %v566, %v557
    %v583 = vsub.f32 %v567, %v557
    %v584 = vsub.f32 %v568, %v557
    %v585 = vsub.f32 %v569, %v557
    %v586 = vsub.f32 %v570, %v557
    %v587 = vsub.f32 %v571, %v557
    %v588 = vsub.f32 %v572, %v557
    %v589 = vsub.f32 %v573, %v557
    %v590 = vsel %vm78, %v582, -inf
    %591 = vmax.xlane.f32.xlu0 %v590
    %v592 = vpop.xlane.xlu0 %591
    %v593 = vsel %vm78, %v583, -inf
    %594 = vmax.xlane.f32.xlu0 %v593
    %v595 = vpop.xlane.xlu0 %594
    %v596 = vsel %vm78, %v584, -inf
    %597 = vmax.xlane.f32.xlu0 %v596
    %v598 = vpop.xlane.xlu0 %597
    %v599 = vsel %vm78, %v585, -inf
    %600 = vmax.xlane.f32.xlu0 %v599
    %v601 = vpop.xlane.xlu0 %600
    %v602 = vsel %vm78, %v586, -inf
    %603 = vmax.xlane.f32.xlu0 %v602
    %v604 = vpop.xlane.xlu0 %603
    %v605 = vsel %vm78, %v587, -inf
    %606 = vmax.xlane.f32.xlu0 %v605
    %v607 = vpop.xlane.xlu0 %606
    %v608 = vsel %vm78, %v588, -inf
    %609 = vmax.xlane.f32.xlu0 %v608
    %v610 = vpop.xlane.xlu0 %609
    %v611 = vsel %vm78, %v589, -inf
    %612 = vmax.xlane.f32.xlu0 %v611
    %v613 = vpop.xlane.xlu0 %612
    %v614 = vsub.f32 %v582, %v592
    %v615 = vsub.f32 %v583, %v595
    %v616 = vsub.f32 %v584, %v598
    %v617 = vsub.f32 %v585, %v601
    %v618 = vsub.f32 %v586, %v604
    %v619 = vsub.f32 %v587, %v607
    %v620 = vsub.f32 %v588, %v610
    %v621 = vsub.f32 %v589, %v613
    %v622 = vmul.f32 %v614, 1.442695
    %v623 = vpow.pop %v622
    %v624 = vmul.f32 %v615, 1.442695
    %v625 = vpow.pop %v624
    %v626 = vmul.f32 %v616, 1.442695
    %v627 = vpow.pop %v626
    %v628 = vmul.f32 %v617, 1.442695
    %v629 = vpow.pop %v628
    %v630 = vmul.f32 %v618, 1.442695
    %v631 = vpow.pop %v630
    %v632 = vmul.f32 %v619, 1.442695
    %v633 = vpow.pop %v632
    %v634 = vmul.f32 %v620, 1.442695
    %v635 = vpow.pop %v634
    %v636 = vmul.f32 %v621, 1.442695
    %v637 = vpow.pop %v636
    %v638 = vsel %vm78, %v623, 0.0
    %639 = vadd.xlane.f32.xlu0 %v638
    %v640 = vpop.xlane.xlu0 %639
    %v641 = vsel %vm78, %v625, 0.0
    %642 = vadd.xlane.f32.xlu0 %v641
    %v643 = vpop.xlane.xlu0 %642
    %v644 = vsel %vm78, %v627, 0.0
    %645 = vadd.xlane.f32.xlu0 %v644
    %v646 = vpop.xlane.xlu0 %645
    %v647 = vsel %vm78, %v629, 0.0
    %648 = vadd.xlane.f32.xlu0 %v647
    %v649 = vpop.xlane.xlu0 %648
    %v650 = vsel %vm78, %v631, 0.0
    %651 = vadd.xlane.f32.xlu0 %v650
    %v652 = vpop.xlane.xlu0 %651
    %v653 = vsel %vm78, %v633, 0.0
    %654 = vadd.xlane.f32.xlu0 %v653
    %v655 = vpop.xlane.xlu0 %654
    %v656 = vsel %vm78, %v635, 0.0
    %657 = vadd.xlane.f32.xlu0 %v656
    %v658 = vpop.xlane.xlu0 %657
    %v659 = vsel %vm78, %v637, 0.0
    %660 = vadd.xlane.f32.xlu0 %v659
    %v661 = vpop.xlane.xlu0 %660
    %v662 = vrcp.pop %v640
    %v663 = vrcp.pop %v643
    %v664 = vrcp.pop %v646
    %v665 = vrcp.pop %v649
    %v666 = vrcp.pop %v652
    %v667 = vrcp.pop %v655
    %v668 = vrcp.pop %v658
    %v669 = vrcp.pop %v661
    %670 = vrot.lane.b32.xlu0 %v137, 24
    %v671 = vpop.permute.xlu0 %670
    %v674 = vsel %vm78, %v623, 0
    %v677 = vsel %vm78, %v625, 0
    %v680 = vsel %vm78, %v627, 0
    %v683 = vsel %vm78, %v629, 0
    %v686 = vsel %vm78, %v631, 0
    %v689 = vsel %vm78, %v633, 0
    %v692 = vsel %vm78, %v635, 0
    %v695 = vsel %vm78, %v637, 0
    %697 = vmatpush.msra.mxu0 0.0
    %698 = vmatpush.msra.mxu0 0.0
    %699 = vmatpush.msra.mxu0 0.0
    %700 = vmatpush.msra.mxu0 0.0
    %701 = vmatpush.msra.mxu0 0.0
    %702 = vmatpush.msra.mxu0 0.0
    %703 = vmatpush.msra.mxu0 0.0
    %704 = vmatpush.msra.mxu0 0.0
    %705 = vmatpush.msra.mxu0 0.0
    %706 = vmatpush.msra.mxu0 0.0
    %707 = vmatpush.msra.mxu0 0.0
    %708 = vmatpush.msra.mxu0 0.0
    %709 = vmatpush.msra.mxu0 0.0
    %710 = vmatpush.msra.mxu0 0.0
    %711 = vmatpush.msra.mxu0 0.0
    %712 = vmatpush.msra.mxu0 %v671
    %713 = vmatmul.f32.gmra.mxu0 %v674
    %v714 = vpop.f32.mrf.mxu0
    %v715 = vadd.f32 0.0, %v714
    %716 = vmatmul.f32.gmra.mxu0 %v677
    %v717 = vpop.f32.mrf.mxu0
    %v718 = vadd.f32 0.0, %v717
    %719 = vmatmul.f32.gmra.mxu0 %v680
    %v720 = vpop.f32.mrf.mxu0
    %v721 = vadd.f32 0.0, %v720
    %722 = vmatmul.f32.gmra.mxu0 %v683
    %v723 = vpop.f32.mrf.mxu0
    %v724 = vadd.f32 0.0, %v723
    %725 = vmatmul.f32.gmra.mxu0 %v686
    %v726 = vpop.f32.mrf.mxu0
    %v727 = vadd.f32 0.0, %v726
    %728 = vmatmul.f32.gmra.mxu0 %v689
    %v729 = vpop.f32.mrf.mxu0
    %v730 = vadd.f32 0.0, %v729
    %731 = vmatmul.f32.gmra.mxu0 %v692
    %v732 = vpop.f32.mrf.mxu0
    %v733 = vadd.f32 0.0, %v732
    %734 = vmatmul.f32.gmra.mxu0 %v695
    %v735 = vpop.f32.mrf.mxu0
    %v736 = vadd.f32 0.0, %v735
    %737 = vdwg.mxu0
    %v738 = vmul.f32 %v640, %v244
    %v739 = vmul.f32 %v643, %v244
    %v740 = vmul.f32 %v646, %v244
    %v741 = vmul.f32 %v649, %v244
    %v742 = vmul.f32 %v652, %v244
    %v743 = vmul.f32 %v655, %v244
    %v744 = vmul.f32 %v658, %v244
    %v745 = vmul.f32 %v661, %v244
    %754 = vrot.lane.b32.xlu0 %v738, 24
    %v755 = vpop.permute.xlu0 %754
    %756 = vrot.lane.b32.xlu0 %v739, 24
    %v757 = vpop.permute.xlu0 %756
    %758 = vrot.lane.b32.xlu0 %v740, 24
    %v759 = vpop.permute.xlu0 %758
    %760 = vrot.lane.b32.xlu0 %v741, 24
    %v761 = vpop.permute.xlu0 %760
    %762 = vrot.lane.b32.xlu0 %v742, 24
    %v763 = vpop.permute.xlu0 %762
    %764 = vrot.lane.b32.xlu0 %v743, 24
    %v765 = vpop.permute.xlu0 %764
    %766 = vrot.lane.b32.xlu0 %v744, 24
    %v767 = vpop.permute.xlu0 %766
    %768 = vrot.lane.b32.xlu0 %v745, 24
    %v769 = vpop.permute.xlu0 %768
    %v778 = vsub.f32 %v715, %v755
    %v779 = vsub.f32 %v718, %v757
    %v780 = vsub.f32 %v721, %v759
    %v781 = vsub.f32 %v724, %v761
    %v782 = vsub.f32 %v727, %v763
    %v783 = vsub.f32 %v730, %v765
    %v784 = vsub.f32 %v733, %v767
    %v785 = vsub.f32 %v736, %v769
    %v786 = vmul.f32 %v778, %v662
    %v787 = vmul.f32 %v779, %v663
    %v788 = vmul.f32 %v780, %v664
    %v789 = vmul.f32 %v781, %v665
    %v790 = vmul.f32 %v782, %v666
    %v791 = vmul.f32 %v783, %v667
    %v792 = vmul.f32 %v784, %v668
    %v793 = vmul.f32 %v785, %v669
    %794 = vrot.lane.b32.xlu0 %v137, 80
    %v795 = vpop.permute.xlu0 %794
    %796 = vrot.lane.b32.xlu0 %v244, 80
    %v797 = vpop.permute.xlu0 %796
    %798 = vrot.lane.b32.xlu0 %v137, 48
    %v799 = vpop.permute.xlu0 %798
    %v800 = vsel %vm78, %v795, 0
    %v802 = vsel %vm78, %v797, 0
    %v804 = vsel %vm78, %v799, 0
    %806 = vmatpush.xpose.msra.mxu0 0.0
    %807 = vmatpush.xpose.msra.mxu0 0.0
    %808 = vmatpush.xpose.msra.mxu0 0.0
    %809 = vmatpush.xpose.msra.mxu0 0.0
    %810 = vmatpush.xpose.msra.mxu0 0.0
    %811 = vmatpush.xpose.msra.mxu0 0.0
    %812 = vmatpush.xpose.msra.mxu0 0.0
    %813 = vmatpush.xpose.msra.mxu0 0.0
    %814 = vmatpush.xpose.msra.mxu0 0.0
    %815 = vmatpush.xpose.msra.mxu0 0.0
    %816 = vmatpush.xpose.msra.mxu0 0.0
    %817 = vmatpush.xpose.msra.mxu0 0.0
    %818 = vmatpush.xpose.msra.mxu0 0.0
    %819 = vmatpush.xpose.msra.mxu0 0.0
    %820 = vmatpush.xpose.msra.mxu0 0.0
    %821 = vmatpush.xpose.msra.mxu0 %v804
    %822 = vmatmul.f32.gmra.mxu0 %v800
    %v823 = vpop.f32.mrf.mxu0
    %v824 = vadd.f32 0.0, %v823
    %825 = vmatmul.f32.gmra.mxu0 %v802
    %v826 = vpop.f32.mrf.mxu0
    %v827 = vadd.f32 0.0, %v826
    %828 = vdwg.mxu0
    %v829 = vmul.f32 %v824, 0.35355338
    %v830 = vmul.f32 %v827, 0.35355338
    %v832 = vrot.slane %v829, 1
    %v833 = vrot.slane %v829, 2
    %v834 = vrot.slane %v829, 3
    %v835 = vrot.slane %v829, 4
    %v836 = vrot.slane %v829, 5
    %v837 = vrot.slane %v829, 6
    %v838 = vrot.slane %v829, 7
    %v839 = vperm.slane %v829, 0
    %v840 = vperm.slane %v832, 0
    %v841 = vperm.slane %v833, 0
    %v842 = vperm.slane %v834, 0
    %v843 = vperm.slane %v835, 0
    %v844 = vperm.slane %v836, 0
    %v845 = vperm.slane %v837, 0
    %v846 = vperm.slane %v838, 0
    %v855 = vsub.f32 %v839, %v830
    %v856 = vsub.f32 %v840, %v830
    %v857 = vsub.f32 %v841, %v830
    %v858 = vsub.f32 %v842, %v830
    %v859 = vsub.f32 %v843, %v830
    %v860 = vsub.f32 %v844, %v830
    %v861 = vsub.f32 %v845, %v830
    %v862 = vsub.f32 %v846, %v830
    %v863 = vsel %vm78, %v855, -inf
    %864 = vmax.xlane.f32.xlu0 %v863
    %v865 = vpop.xlane.xlu0 %864
    %v866 = vsel %vm78, %v856, -inf
    %867 = vmax.xlane.f32.xlu0 %v866
    %v868 = vpop.xlane.xlu0 %867
    %v869 = vsel %vm78, %v857, -inf
    %870 = vmax.xlane.f32.xlu0 %v869
    %v871 = vpop.xlane.xlu0 %870
    %v872 = vsel %vm78, %v858, -inf
    %873 = vmax.xlane.f32.xlu0 %v872
    %v874 = vpop.xlane.xlu0 %873
    %v875 = vsel %vm78, %v859, -inf
    %876 = vmax.xlane.f32.xlu0 %v875
    %v877 = vpop.xlane.xlu0 %876
    %v878 = vsel %vm78, %v860, -inf
    %879 = vmax.xlane.f32.xlu0 %v878
    %v880 = vpop.xlane.xlu0 %879
    %v881 = vsel %vm78, %v861, -inf
    %882 = vmax.xlane.f32.xlu0 %v881
    %v883 = vpop.xlane.xlu0 %882
    %v884 = vsel %vm78, %v862, -inf
    %885 = vmax.xlane.f32.xlu0 %v884
    %v886 = vpop.xlane.xlu0 %885
    %v887 = vsub.f32 %v855, %v865
    %v888 = vsub.f32 %v856, %v868
    %v889 = vsub.f32 %v857, %v871
    %v890 = vsub.f32 %v858, %v874
    %v891 = vsub.f32 %v859, %v877
    %v892 = vsub.f32 %v860, %v880
    %v893 = vsub.f32 %v861, %v883
    %v894 = vsub.f32 %v862, %v886
    %v895 = vmul.f32 %v887, 1.442695
    %v896 = vpow.pop %v895
    %v897 = vmul.f32 %v888, 1.442695
    %v898 = vpow.pop %v897
    %v899 = vmul.f32 %v889, 1.442695
    %v900 = vpow.pop %v899
    %v901 = vmul.f32 %v890, 1.442695
    %v902 = vpow.pop %v901
    %v903 = vmul.f32 %v891, 1.442695
    %v904 = vpow.pop %v903
    %v905 = vmul.f32 %v892, 1.442695
    %v906 = vpow.pop %v905
    %v907 = vmul.f32 %v893, 1.442695
    %v908 = vpow.pop %v907
    %v909 = vmul.f32 %v894, 1.442695
    %v910 = vpow.pop %v909
    %v911 = vsel %vm78, %v896, 0.0
    %912 = vadd.xlane.f32.xlu0 %v911
    %v913 = vpop.xlane.xlu0 %912
    %v914 = vsel %vm78, %v898, 0.0
    %915 = vadd.xlane.f32.xlu0 %v914
    %v916 = vpop.xlane.xlu0 %915
    %v917 = vsel %vm78, %v900, 0.0
    %918 = vadd.xlane.f32.xlu0 %v917
    %v919 = vpop.xlane.xlu0 %918
    %v920 = vsel %vm78, %v902, 0.0
    %921 = vadd.xlane.f32.xlu0 %v920
    %v922 = vpop.xlane.xlu0 %921
    %v923 = vsel %vm78, %v904, 0.0
    %924 = vadd.xlane.f32.xlu0 %v923
    %v925 = vpop.xlane.xlu0 %924
    %v926 = vsel %vm78, %v906, 0.0
    %927 = vadd.xlane.f32.xlu0 %v926
    %v928 = vpop.xlane.xlu0 %927
    %v929 = vsel %vm78, %v908, 0.0
    %930 = vadd.xlane.f32.xlu0 %v929
    %v931 = vpop.xlane.xlu0 %930
    %v932 = vsel %vm78, %v910, 0.0
    %933 = vadd.xlane.f32.xlu0 %v932
    %v934 = vpop.xlane.xlu0 %933
    %v935 = vrcp.pop %v913
    %v936 = vrcp.pop %v916
    %v937 = vrcp.pop %v919
    %v938 = vrcp.pop %v922
    %v939 = vrcp.pop %v925
    %v940 = vrcp.pop %v928
    %v941 = vrcp.pop %v931
    %v942 = vrcp.pop %v934
    %943 = vrot.lane.b32.xlu0 %v137, 16
    %v944 = vpop.permute.xlu0 %943
    %v947 = vsel %vm78, %v896, 0
    %v950 = vsel %vm78, %v898, 0
    %v953 = vsel %vm78, %v900, 0
    %v956 = vsel %vm78, %v902, 0
    %v959 = vsel %vm78, %v904, 0
    %v962 = vsel %vm78, %v906, 0
    %v965 = vsel %vm78, %v908, 0
    %v968 = vsel %vm78, %v910, 0
    %970 = vmatpush.msra.mxu0 0.0
    %971 = vmatpush.msra.mxu0 0.0
    %972 = vmatpush.msra.mxu0 0.0
    %973 = vmatpush.msra.mxu0 0.0
    %974 = vmatpush.msra.mxu0 0.0
    %975 = vmatpush.msra.mxu0 0.0
    %976 = vmatpush.msra.mxu0 0.0
    %977 = vmatpush.msra.mxu0 0.0
    %978 = vmatpush.msra.mxu0 0.0
    %979 = vmatpush.msra.mxu0 0.0
    %980 = vmatpush.msra.mxu0 0.0
    %981 = vmatpush.msra.mxu0 0.0
    %982 = vmatpush.msra.mxu0 0.0
    %983 = vmatpush.msra.mxu0 0.0
    %984 = vmatpush.msra.mxu0 0.0
    %985 = vmatpush.msra.mxu0 %v944
    %986 = vmatmul.f32.gmra.mxu0 %v947
    %v987 = vpop.f32.mrf.mxu0
    %v988 = vadd.f32 0.0, %v987
    %989 = vmatmul.f32.gmra.mxu0 %v950
    %v990 = vpop.f32.mrf.mxu0
    %v991 = vadd.f32 0.0, %v990
    %992 = vmatmul.f32.gmra.mxu0 %v953
    %v993 = vpop.f32.mrf.mxu0
    %v994 = vadd.f32 0.0, %v993
    %995 = vmatmul.f32.gmra.mxu0 %v956
    %v996 = vpop.f32.mrf.mxu0
    %v997 = vadd.f32 0.0, %v996
    %998 = vmatmul.f32.gmra.mxu0 %v959
    %v999 = vpop.f32.mrf.mxu0
    %v1000 = vadd.f32 0.0, %v999
    %1001 = vmatmul.f32.gmra.mxu0 %v962
    %v1002 = vpop.f32.mrf.mxu0
    %v1003 = vadd.f32 0.0, %v1002
    %1004 = vmatmul.f32.gmra.mxu0 %v965
    %v1005 = vpop.f32.mrf.mxu0
    %v1006 = vadd.f32 0.0, %v1005
    %1007 = vmatmul.f32.gmra.mxu0 %v968
    %v1008 = vpop.f32.mrf.mxu0
    %v1009 = vadd.f32 0.0, %v1008
    %1010 = vdwg.mxu0
    %v1011 = vmul.f32 %v913, %v244
    %v1012 = vmul.f32 %v916, %v244
    %v1013 = vmul.f32 %v919, %v244
    %v1014 = vmul.f32 %v922, %v244
    %v1015 = vmul.f32 %v925, %v244
    %v1016 = vmul.f32 %v928, %v244
    %v1017 = vmul.f32 %v931, %v244
    %v1018 = vmul.f32 %v934, %v244
    %1027 = vrot.lane.b32.xlu0 %v1011, 16
    %v1028 = vpop.permute.xlu0 %1027
    %1029 = vrot.lane.b32.xlu0 %v1012, 16
    %v1030 = vpop.permute.xlu0 %1029
    %1031 = vrot.lane.b32.xlu0 %v1013, 16
    %v1032 = vpop.permute.xlu0 %1031
    %1033 = vrot.lane.b32.xlu0 %v1014, 16
    %v1034 = vpop.permute.xlu0 %1033
    %1035 = vrot.lane.b32.xlu0 %v1015, 16
    %v1036 = vpop.permute.xlu0 %1035
    %1037 = vrot.lane.b32.xlu0 %v1016, 16
    %v1038 = vpop.permute.xlu0 %1037
    %1039 = vrot.lane.b32.xlu0 %v1017, 16
    %v1040 = vpop.permute.xlu0 %1039
    %1041 = vrot.lane.b32.xlu0 %v1018, 16
    %v1042 = vpop.permute.xlu0 %1041
    %v1051 = vsub.f32 %v988, %v1028
    %v1052 = vsub.f32 %v991, %v1030
    %v1053 = vsub.f32 %v994, %v1032
    %v1054 = vsub.f32 %v997, %v1034
    %v1055 = vsub.f32 %v1000, %v1036
    %v1056 = vsub.f32 %v1003, %v1038
    %v1057 = vsub.f32 %v1006, %v1040
    %v1058 = vsub.f32 %v1009, %v1042
    %v1059 = vmul.f32 %v1051, %v935
    %v1060 = vmul.f32 %v1052, %v936
    %v1061 = vmul.f32 %v1053, %v937
    %v1062 = vmul.f32 %v1054, %v938
    %v1063 = vmul.f32 %v1055, %v939
    %v1064 = vmul.f32 %v1056, %v940
    %v1065 = vmul.f32 %v1057, %v941
    %v1066 = vmul.f32 %v1058, %v942
    %1067 = vrot.lane.b32.xlu0 %v137, 72
    %v1068 = vpop.permute.xlu0 %1067
    %1069 = vrot.lane.b32.xlu0 %v244, 72
    %v1070 = vpop.permute.xlu0 %1069
    %1071 = vrot.lane.b32.xlu0 %v137, 40
    %v1072 = vpop.permute.xlu0 %1071
    %v1073 = vsel %vm78, %v1068, 0
    %v1075 = vsel %vm78, %v1070, 0
    %v1077 = vsel %vm78, %v1072, 0
    %1079 = vmatpush.xpose.msra.mxu0 0.0
    %1080 = vmatpush.xpose.msra.mxu0 0.0
    %1081 = vmatpush.xpose.msra.mxu0 0.0
    %1082 = vmatpush.xpose.msra.mxu0 0.0
    %1083 = vmatpush.xpose.msra.mxu0 0.0
    %1084 = vmatpush.xpose.msra.mxu0 0.0
    %1085 = vmatpush.xpose.msra.mxu0 0.0
    %1086 = vmatpush.xpose.msra.mxu0 0.0
    %1087 = vmatpush.xpose.msra.mxu0 0.0
    %1088 = vmatpush.xpose.msra.mxu0 0.0
    %1089 = vmatpush.xpose.msra.mxu0 0.0
    %1090 = vmatpush.xpose.msra.mxu0 0.0
    %1091 = vmatpush.xpose.msra.mxu0 0.0
    %1092 = vmatpush.xpose.msra.mxu0 0.0
    %1093 = vmatpush.xpose.msra.mxu0 0.0
    %1094 = vmatpush.xpose.msra.mxu0 %v1077
    %1095 = vmatmul.f32.gmra.mxu0 %v1073
    %v1096 = vpop.f32.mrf.mxu0
    %v1097 = vadd.f32 0.0, %v1096
    %1098 = vmatmul.f32.gmra.mxu0 %v1075
    %v1099 = vpop.f32.mrf.mxu0
    %v1100 = vadd.f32 0.0, %v1099
    %1101 = vdwg.mxu0
    %v1102 = vmul.f32 %v1097, 0.35355338
    %v1103 = vmul.f32 %v1100, 0.35355338
    %v1105 = vrot.slane %v1102, 1
    %v1106 = vrot.slane %v1102, 2
    %v1107 = vrot.slane %v1102, 3
    %v1108 = vrot.slane %v1102, 4
    %v1109 = vrot.slane %v1102, 5
    %v1110 = vrot.slane %v1102, 6
    %v1111 = vrot.slane %v1102, 7
    %v1112 = vperm.slane %v1102, 0
    %v1113 = vperm.slane %v1105, 0
    %v1114 = vperm.slane %v1106, 0
    %v1115 = vperm.slane %v1107, 0
    %v1116 = vperm.slane %v1108, 0
    %v1117 = vperm.slane %v1109, 0
    %v1118 = vperm.slane %v1110, 0
    %v1119 = vperm.slane %v1111, 0
    %v1128 = vsub.f32 %v1112, %v1103
    %v1129 = vsub.f32 %v1113, %v1103
    %v1130 = vsub.f32 %v1114, %v1103
    %v1131 = vsub.f32 %v1115, %v1103
    %v1132 = vsub.f32 %v1116, %v1103
    %v1133 = vsub.f32 %v1117, %v1103
    %v1134 = vsub.f32 %v1118, %v1103
    %v1135 = vsub.f32 %v1119, %v1103
    %v1136 = vsel %vm78, %v1128, -inf
    %1137 = vmax.xlane.f32.xlu0 %v1136
    %v1138 = vpop.xlane.xlu0 %1137
    %v1139 = vsel %vm78, %v1129, -inf
    %1140 = vmax.xlane.f32.xlu0 %v1139
    %v1141 = vpop.xlane.xlu0 %1140
    %v1142 = vsel %vm78, %v1130, -inf
    %1143 = vmax.xlane.f32.xlu0 %v1142
    %v1144 = vpop.xlane.xlu0 %1143
    %v1145 = vsel %vm78, %v1131, -inf
    %1146 = vmax.xlane.f32.xlu0 %v1145
    %v1147 = vpop.xlane.xlu0 %1146
    %v1148 = vsel %vm78, %v1132, -inf
    %1149 = vmax.xlane.f32.xlu0 %v1148
    %v1150 = vpop.xlane.xlu0 %1149
    %v1151 = vsel %vm78, %v1133, -inf
    %1152 = vmax.xlane.f32.xlu0 %v1151
    %v1153 = vpop.xlane.xlu0 %1152
    %v1154 = vsel %vm78, %v1134, -inf
    %1155 = vmax.xlane.f32.xlu0 %v1154
    %v1156 = vpop.xlane.xlu0 %1155
    %v1157 = vsel %vm78, %v1135, -inf
    %1158 = vmax.xlane.f32.xlu0 %v1157
    %v1159 = vpop.xlane.xlu0 %1158
    %v1160 = vsub.f32 %v1128, %v1138
    %v1161 = vsub.f32 %v1129, %v1141
    %v1162 = vsub.f32 %v1130, %v1144
    %v1163 = vsub.f32 %v1131, %v1147
    %v1164 = vsub.f32 %v1132, %v1150
    %v1165 = vsub.f32 %v1133, %v1153
    %v1166 = vsub.f32 %v1134, %v1156
    %v1167 = vsub.f32 %v1135, %v1159
    %v1168 = vmul.f32 %v1160, 1.442695
    %v1169 = vpow.pop %v1168
    %v1170 = vmul.f32 %v1161, 1.442695
    %v1171 = vpow.pop %v1170
    %v1172 = vmul.f32 %v1162, 1.442695
    %v1173 = vpow.pop %v1172
    %v1174 = vmul.f32 %v1163, 1.442695
    %v1175 = vpow.pop %v1174
    %v1176 = vmul.f32 %v1164, 1.442695
    %v1177 = vpow.pop %v1176
    %v1178 = vmul.f32 %v1165, 1.442695
    %v1179 = vpow.pop %v1178
    %v1180 = vmul.f32 %v1166, 1.442695
    %v1181 = vpow.pop %v1180
    %v1182 = vmul.f32 %v1167, 1.442695
    %v1183 = vpow.pop %v1182
    %v1184 = vsel %vm78, %v1169, 0.0
    %1185 = vadd.xlane.f32.xlu0 %v1184
    %v1186 = vpop.xlane.xlu0 %1185
    %v1187 = vsel %vm78, %v1171, 0.0
    %1188 = vadd.xlane.f32.xlu0 %v1187
    %v1189 = vpop.xlane.xlu0 %1188
    %v1190 = vsel %vm78, %v1173, 0.0
    %1191 = vadd.xlane.f32.xlu0 %v1190
    %v1192 = vpop.xlane.xlu0 %1191
    %v1193 = vsel %vm78, %v1175, 0.0
    %1194 = vadd.xlane.f32.xlu0 %v1193
    %v1195 = vpop.xlane.xlu0 %1194
    %v1196 = vsel %vm78, %v1177, 0.0
    %1197 = vadd.xlane.f32.xlu0 %v1196
    %v1198 = vpop.xlane.xlu0 %1197
    %v1199 = vsel %vm78, %v1179, 0.0
    %1200 = vadd.xlane.f32.xlu0 %v1199
    %v1201 = vpop.xlane.xlu0 %1200
    %v1202 = vsel %vm78, %v1181, 0.0
    %1203 = vadd.xlane.f32.xlu0 %v1202
    %v1204 = vpop.xlane.xlu0 %1203
    %v1205 = vsel %vm78, %v1183, 0.0
    %1206 = vadd.xlane.f32.xlu0 %v1205
    %v1207 = vpop.xlane.xlu0 %1206
    %v1208 = vrcp.pop %v1186
    %v1209 = vrcp.pop %v1189
    %v1210 = vrcp.pop %v1192
    %v1211 = vrcp.pop %v1195
    %v1212 = vrcp.pop %v1198
    %v1213 = vrcp.pop %v1201
    %v1214 = vrcp.pop %v1204
    %v1215 = vrcp.pop %v1207
    %1216 = vrot.lane.b32.xlu0 %v137, 8
    %v1217 = vpop.permute.xlu0 %1216
    %v1220 = vsel %vm78, %v1169, 0
    %v1223 = vsel %vm78, %v1171, 0
    %v1226 = vsel %vm78, %v1173, 0
    %v1229 = vsel %vm78, %v1175, 0
    %v1232 = vsel %vm78, %v1177, 0
    %v1235 = vsel %vm78, %v1179, 0
    %v1238 = vsel %vm78, %v1181, 0
    %v1241 = vsel %vm78, %v1183, 0
    %1243 = vmatpush.msra.mxu0 0.0
    %1244 = vmatpush.msra.mxu0 0.0
    %1245 = vmatpush.msra.mxu0 0.0
    %1246 = vmatpush.msra.mxu0 0.0
    %1247 = vmatpush.msra.mxu0 0.0
    %1248 = vmatpush.msra.mxu0 0.0
    %1249 = vmatpush.msra.mxu0 0.0
    %1250 = vmatpush.msra.mxu0 0.0
    %1251 = vmatpush.msra.mxu0 0.0
    %1252 = vmatpush.msra.mxu0 0.0
    %1253 = vmatpush.msra.mxu0 0.0
    %1254 = vmatpush.msra.mxu0 0.0
    %1255 = vmatpush.msra.mxu0 0.0
    %1256 = vmatpush.msra.mxu0 0.0
    %1257 = vmatpush.msra.mxu0 0.0
    %1258 = vmatpush.msra.mxu0 %v1217
    %1259 = vmatmul.f32.gmra.mxu0 %v1220
    %v1260 = vpop.f32.mrf.mxu0
    %v1261 = vadd.f32 0.0, %v1260
    %1262 = vmatmul.f32.gmra.mxu0 %v1223
    %v1263 = vpop.f32.mrf.mxu0
    %v1264 = vadd.f32 0.0, %v1263
    %1265 = vmatmul.f32.gmra.mxu0 %v1226
    %v1266 = vpop.f32.mrf.mxu0
    %v1267 = vadd.f32 0.0, %v1266
    %1268 = vmatmul.f32.gmra.mxu0 %v1229
    %v1269 = vpop.f32.mrf.mxu0
    %v1270 = vadd.f32 0.0, %v1269
    %1271 = vmatmul.f32.gmra.mxu0 %v1232
    %v1272 = vpop.f32.mrf.mxu0
    %v1273 = vadd.f32 0.0, %v1272
    %1274 = vmatmul.f32.gmra.mxu0 %v1235
    %v1275 = vpop.f32.mrf.mxu0
    %v1276 = vadd.f32 0.0, %v1275
    %1277 = vmatmul.f32.gmra.mxu0 %v1238
    %v1278 = vpop.f32.mrf.mxu0
    %v1279 = vadd.f32 0.0, %v1278
    %1280 = vmatmul.f32.gmra.mxu0 %v1241
    %v1281 = vpop.f32.mrf.mxu0
    %v1282 = vadd.f32 0.0, %v1281
    %1283 = vdwg.mxu0
    %v1284 = vmul.f32 %v1186, %v244
    %v1285 = vmul.f32 %v1189, %v244
    %v1286 = vmul.f32 %v1192, %v244
    %v1287 = vmul.f32 %v1195, %v244
    %v1288 = vmul.f32 %v1198, %v244
    %v1289 = vmul.f32 %v1201, %v244
    %v1290 = vmul.f32 %v1204, %v244
    %v1291 = vmul.f32 %v1207, %v244
    %1300 = vrot.lane.b32.xlu0 %v1284, 8
    %v1301 = vpop.permute.xlu0 %1300
    %1302 = vrot.lane.b32.xlu0 %v1285, 8
    %v1303 = vpop.permute.xlu0 %1302
    %1304 = vrot.lane.b32.xlu0 %v1286, 8
    %v1305 = vpop.permute.xlu0 %1304
    %1306 = vrot.lane.b32.xlu0 %v1287, 8
    %v1307 = vpop.permute.xlu0 %1306
    %1308 = vrot.lane.b32.xlu0 %v1288, 8
    %v1309 = vpop.permute.xlu0 %1308
    %1310 = vrot.lane.b32.xlu0 %v1289, 8
    %v1311 = vpop.permute.xlu0 %1310
    %1312 = vrot.lane.b32.xlu0 %v1290, 8
    %v1313 = vpop.permute.xlu0 %1312
    %1314 = vrot.lane.b32.xlu0 %v1291, 8
    %v1315 = vpop.permute.xlu0 %1314
    %v1324 = vsub.f32 %v1261, %v1301
    %v1325 = vsub.f32 %v1264, %v1303
    %v1326 = vsub.f32 %v1267, %v1305
    %v1327 = vsub.f32 %v1270, %v1307
    %v1328 = vsub.f32 %v1273, %v1309
    %v1329 = vsub.f32 %v1276, %v1311
    %v1330 = vsub.f32 %v1279, %v1313
    %v1331 = vsub.f32 %v1282, %v1315
    %v1332 = vmul.f32 %v1324, %v1208
    %v1333 = vmul.f32 %v1325, %v1209
    %v1334 = vmul.f32 %v1326, %v1210
    %v1335 = vmul.f32 %v1327, %v1211
    %v1336 = vmul.f32 %v1328, %v1212
    %v1337 = vmul.f32 %v1329, %v1213
    %v1338 = vmul.f32 %v1330, %v1214
    %v1339 = vmul.f32 %v1331, %v1215
    %1348 = vrot.lane.b32.xlu0 %v786, 8
    %v1349 = vpop.permute.xlu0 %1348
    %1350 = vrot.lane.b32.xlu0 %v787, 8
    %v1351 = vpop.permute.xlu0 %1350
    %1352 = vrot.lane.b32.xlu0 %v788, 8
    %v1353 = vpop.permute.xlu0 %1352
    %1354 = vrot.lane.b32.xlu0 %v789, 8
    %v1355 = vpop.permute.xlu0 %1354
    %1356 = vrot.lane.b32.xlu0 %v790, 8
    %v1357 = vpop.permute.xlu0 %1356
    %1358 = vrot.lane.b32.xlu0 %v791, 8
    %v1359 = vpop.permute.xlu0 %1358
    %1360 = vrot.lane.b32.xlu0 %v792, 8
    %v1361 = vpop.permute.xlu0 %1360
    %1362 = vrot.lane.b32.xlu0 %v793, 8
    %v1363 = vpop.permute.xlu0 %1362
    %1380 = vrot.lane.b32.xlu0 %v1059, 16
    %v1381 = vpop.permute.xlu0 %1380
    %1382 = vrot.lane.b32.xlu0 %v1060, 16
    %v1383 = vpop.permute.xlu0 %1382
    %1384 = vrot.lane.b32.xlu0 %v1061, 16
    %v1385 = vpop.permute.xlu0 %1384
    %1386 = vrot.lane.b32.xlu0 %v1062, 16
    %v1387 = vpop.permute.xlu0 %1386
    %1388 = vrot.lane.b32.xlu0 %v1063, 16
    %v1389 = vpop.permute.xlu0 %1388
    %1390 = vrot.lane.b32.xlu0 %v1064, 16
    %v1391 = vpop.permute.xlu0 %1390
    %1392 = vrot.lane.b32.xlu0 %v1065, 16
    %v1393 = vpop.permute.xlu0 %1392
    %1394 = vrot.lane.b32.xlu0 %v1066, 16
    %v1395 = vpop.permute.xlu0 %1394
    %1412 = vrot.lane.b32.xlu0 %v1332, 24
    %v1413 = vpop.permute.xlu0 %1412
    %1414 = vrot.lane.b32.xlu0 %v1333, 24
    %v1415 = vpop.permute.xlu0 %1414
    %1416 = vrot.lane.b32.xlu0 %v1334, 24
    %v1417 = vpop.permute.xlu0 %1416
    %1418 = vrot.lane.b32.xlu0 %v1335, 24
    %v1419 = vpop.permute.xlu0 %1418
    %1420 = vrot.lane.b32.xlu0 %v1336, 24
    %v1421 = vpop.permute.xlu0 %1420
    %1422 = vrot.lane.b32.xlu0 %v1337, 24
    %v1423 = vpop.permute.xlu0 %1422
    %1424 = vrot.lane.b32.xlu0 %v1338, 24
    %v1425 = vpop.permute.xlu0 %1424
    %1426 = vrot.lane.b32.xlu0 %v1339, 24
    %v1427 = vpop.permute.xlu0 %1426
    %v1436 = vsel %vm78, %v513, %v1349
    %v1437 = vsel %vm78, %v514, %v1351
    %v1438 = vsel %vm78, %v515, %v1353
    %v1439 = vsel %vm78, %v516, %v1355
    %v1440 = vsel %vm78, %v517, %v1357
    %v1441 = vsel %vm78, %v518, %v1359
    %v1442 = vsel %vm78, %v519, %v1361
    %v1443 = vsel %vm78, %v520, %v1363
    %vm1444 = vcmask 130048
    %v1445 = vsel %vm1444, %v1436, %v1381
    %v1446 = vsel %vm1444, %v1437, %v1383
    %v1447 = vsel %vm1444, %v1438, %v1385
    %v1448 = vsel %vm1444, %v1439, %v1387
    %v1449 = vsel %vm1444, %v1440, %v1389
    %v1450 = vsel %vm1444, %v1441, %v1391
    %v1451 = vsel %vm1444, %v1442, %v1393
    %v1452 = vsel %vm1444, %v1443, %v1395
    %vm1453 = vcmask 195584
    %v1454 = vsel %vm1453, %v1445, %v1413
    %v1455 = vsel %vm1453, %v1446, %v1415
    %v1456 = vsel %vm1453, %v1447, %v1417
    %v1457 = vsel %vm1453, %v1448, %v1419
    %v1458 = vsel %vm1453, %v1449, %v1421
    %v1459 = vsel %vm1453, %v1450, %v1423
    %v1460 = vsel %vm1453, %v1451, %v1425
    %v1461 = vsel %vm1453, %v1452, %v1427
    %v1462 = vperm.slane %v42, 1
    %v1464 = vsel %vm115, %v1454, 0
    %v1467 = vsel %vm115, %v1455, 0
    %v1470 = vsel %vm115, %v1456, 0
    %v1473 = vsel %vm115, %v1457, 0
    %v1476 = vsel %vm115, %v1458, 0
    %v1479 = vsel %vm115, %v1459, 0
    %v1482 = vsel %vm115, %v1460, 0
    %v1485 = vsel %vm115, %v1461, 0
    %1487 = vmatpush.msra.mxu0 0.0
    %1488 = vmatpush.msra.mxu0 0.0
    %1489 = vmatpush.msra.mxu0 0.0
    %1490 = vmatpush.msra.mxu0 0.0
    %1491 = vmatpush.msra.mxu0 0.0
    %1492 = vmatpush.msra.mxu0 0.0
    %1493 = vmatpush.msra.mxu0 0.0
    %1494 = vmatpush.msra.mxu0 0.0
    %1495 = vmatpush.msra.mxu0 0.0
    %1496 = vmatpush.msra.mxu0 0.0
    %1497 = vmatpush.msra.mxu0 0.0
    %1498 = vmatpush.msra.mxu0 0.0
    %1499 = vmatpush.msra.mxu0 %v61
    %1500 = vmatpush.msra.mxu0 %v60
    %1501 = vmatpush.msra.mxu0 %v59
    %1502 = vmatpush.msra.mxu0 %v58
    %1503 = vmatmul.f32.gmra.mxu0 %v1464
    %v1504 = vpop.f32.mrf.mxu0
    %v1505 = vadd.f32 %v1462, %v1504
    %1506 = vmatmul.f32.gmra.mxu0 %v1467
    %v1507 = vpop.f32.mrf.mxu0
    %v1508 = vadd.f32 %v1462, %v1507
    %1509 = vmatmul.f32.gmra.mxu0 %v1470
    %v1510 = vpop.f32.mrf.mxu0
    %v1511 = vadd.f32 %v1462, %v1510
    %1512 = vmatmul.f32.gmra.mxu0 %v1473
    %v1513 = vpop.f32.mrf.mxu0
    %v1514 = vadd.f32 %v1462, %v1513
    %1515 = vmatmul.f32.gmra.mxu0 %v1476
    %v1516 = vpop.f32.mrf.mxu0
    %v1517 = vadd.f32 %v1462, %v1516
    %1518 = vmatmul.f32.gmra.mxu0 %v1479
    %v1519 = vpop.f32.mrf.mxu0
    %v1520 = vadd.f32 %v1462, %v1519
    %1521 = vmatmul.f32.gmra.mxu0 %v1482
    %v1522 = vpop.f32.mrf.mxu0
    %v1523 = vadd.f32 %v1462, %v1522
    %1524 = vmatmul.f32.gmra.mxu0 %v1485
    %v1525 = vpop.f32.mrf.mxu0
    %v1526 = vadd.f32 %v1462, %v1525
    %1527 = vdwg.mxu0
    %v1528 = vrot.slane %v108, 1
    %v1529 = vrot.slane %v108, 2
    %v1530 = vrot.slane %v108, 3
    %v1531 = vrot.slane %v108, 4
    %v1532 = vrot.slane %v108, 5
    %v1533 = vrot.slane %v108, 6
    %v1534 = vrot.slane %v108, 7
    %v1535 = vperm.slane %v108, 0
    %v1536 = vperm.slane %v1528, 0
    %v1537 = vperm.slane %v1529, 0
    %v1538 = vperm.slane %v1530, 0
    %v1539 = vperm.slane %v1531, 0
    %v1540 = vperm.slane %v1532, 0
    %v1541 = vperm.slane %v1533, 0
    %v1542 = vperm.slane %v1534, 0
    %v1551 = vadd.f32 %v1505, %v1535
    %v1552 = vadd.f32 %v1508, %v1536
    %v1553 = vadd.f32 %v1511, %v1537
    %v1554 = vadd.f32 %v1514, %v1538
    %v1555 = vadd.f32 %v1517, %v1539
    %v1556 = vadd.f32 %v1520, %v1540
    %v1557 = vadd.f32 %v1523, %v1541
    %v1558 = vadd.f32 %v1526, %v1542
    %v1559 = vsel %vm115, %v1551, 0.0
    %1560 = vadd.xlane.f32.xlu0 %v1559
    %v1561 = vpop.xlane.xlu0 %1560
    %v1562 = vsel %vm115, %v1552, 0.0
    %1563 = vadd.xlane.f32.xlu0 %v1562
    %v1564 = vpop.xlane.xlu0 %1563
    %v1565 = vsel %vm115, %v1553, 0.0
    %1566 = vadd.xlane.f32.xlu0 %v1565
    %v1567 = vpop.xlane.xlu0 %1566
    %v1568 = vsel %vm115, %v1554, 0.0
    %1569 = vadd.xlane.f32.xlu0 %v1568
    %v1570 = vpop.xlane.xlu0 %1569
    %v1571 = vsel %vm115, %v1555, 0.0
    %1572 = vadd.xlane.f32.xlu0 %v1571
    %v1573 = vpop.xlane.xlu0 %1572
    %v1574 = vsel %vm115, %v1556, 0.0
    %1575 = vadd.xlane.f32.xlu0 %v1574
    %v1576 = vpop.xlane.xlu0 %1575
    %v1577 = vsel %vm115, %v1557, 0.0
    %1578 = vadd.xlane.f32.xlu0 %v1577
    %v1579 = vpop.xlane.xlu0 %1578
    %v1580 = vsel %vm115, %v1558, 0.0
    %1581 = vadd.xlane.f32.xlu0 %v1580
    %v1582 = vpop.xlane.xlu0 %1581
    %v1583 = vrcp.pop 32.0
    %v1584 = vmul.f32 32.0, %v1583
    %v1585 = vsub.f32 1.0, %v1584
    %v1586 = vmul.f32 %v1583, %v1585
    %v1587 = vadd.f32 %v1583, %v1586
    %vm1588 = vweird.f32 %v1583
    %v1589 = vsel %vm1588, %v1583, %v1587
    %v1590 = vmul.f32 %v1561, %v1589
    %v1591 = vmul.f32 %v1564, %v1589
    %v1592 = vmul.f32 %v1567, %v1589
    %v1593 = vmul.f32 %v1570, %v1589
    %v1594 = vmul.f32 %v1573, %v1589
    %v1595 = vmul.f32 %v1576, %v1589
    %v1596 = vmul.f32 %v1579, %v1589
    %v1597 = vmul.f32 %v1582, %v1589
    %v1598 = vsub.f32 %v1551, %v1590
    %v1599 = vsub.f32 %v1552, %v1591
    %v1600 = vsub.f32 %v1553, %v1592
    %v1601 = vsub.f32 %v1554, %v1593
    %v1602 = vsub.f32 %v1555, %v1594
    %v1603 = vsub.f32 %v1556, %v1595
    %v1604 = vsub.f32 %v1557, %v1596
    %v1605 = vsub.f32 %v1558, %v1597
    %v1606 = vmul.f32 %v1598, %v1598
    %v1607 = vmul.f32 %v1599, %v1599
    %v1608 = vmul.f32 %v1600, %v1600
    %v1609 = vmul.f32 %v1601, %v1601
    %v1610 = vmul.f32 %v1602, %v1602
    %v1611 = vmul.f32 %v1603, %v1603
    %v1612 = vmul.f32 %v1604, %v1604
    %v1613 = vmul.f32 %v1605, %v1605
    %v1614 = vsel %vm115, %v1606, 0.0
    %1615 = vadd.xlane.f32.xlu0 %v1614
    %v1616 = vpop.xlane.xlu0 %1615
    %v1617 = vsel %vm115, %v1607, 0.0
    %1618 = vadd.xlane.f32.xlu0 %v1617
    %v1619 = vpop.xlane.xlu0 %1618
    %v1620 = vsel %vm115, %v1608, 0.0
    %1621 = vadd.xlane.f32.xlu0 %v1620
    %v1622 = vpop.xlane.xlu0 %1621
    %v1623 = vsel %vm115, %v1609, 0.0
    %1624 = vadd.xlane.f32.xlu0 %v1623
    %v1625 = vpop.xlane.xlu0 %1624
    %v1626 = vsel %vm115, %v1610, 0.0
    %1627 = vadd.xlane.f32.xlu0 %v1626
    %v1628 = vpop.xlane.xlu0 %1627
    %v1629 = vsel %vm115, %v1611, 0.0
    %1630 = vadd.xlane.f32.xlu0 %v1629
    %v1631 = vpop.xlane.xlu0 %1630
    %v1632 = vsel %vm115, %v1612, 0.0
    %1633 = vadd.xlane.f32.xlu0 %v1632
    %v1634 = vpop.xlane.xlu0 %1633
    %v1635 = vsel %vm115, %v1613, 0.0
    %1636 = vadd.xlane.f32.xlu0 %v1635
    %v1637 = vpop.xlane.xlu0 %1636
    %v1638 = vmul.f32 %v1616, %v1589
    %v1639 = vmul.f32 %v1619, %v1589
    %v1640 = vmul.f32 %v1622, %v1589
    %v1641 = vmul.f32 %v1625, %v1589
    %v1642 = vmul.f32 %v1628, %v1589
    %v1643 = vmul.f32 %v1631, %v1589
    %v1644 = vmul.f32 %v1634, %v1589
    %v1645 = vmul.f32 %v1637, %v1589
    %v1646 = vadd.f32 %v1638, 1e-05
    %v1647 = vadd.f32 %v1639, 1e-05
    %v1648 = vadd.f32 %v1640, 1e-05
    %v1649 = vadd.f32 %v1641, 1e-05
    %v1650 = vadd.f32 %v1642, 1e-05
    %v1651 = vadd.f32 %v1643, 1e-05
    %v1652 = vadd.f32 %v1644, 1e-05
    %v1653 = vadd.f32 %v1645, 1e-05
    %v1654 = vrsqrt.pop %v1646
    %v1655 = vmul.f32 %v1654, %v1646
    %v1656 = vmul.f32 %v1655, %v1654
    %v1657 = vmul.f32 0.5, %v1656
    %v1658 = vsub.f32 1.5, %v1657
    %v1659 = vmul.f32 %v1654, %v1658
    %vm1660 = vweird.f32 %v1646
    %vm1661 = vweird.f32 %v1654
    %vm1662 = vmor %vm1660, %vm1661
    %v1663 = vsel %vm1662, %v1654, %v1659
    %v1664 = vrsqrt.pop %v1647
    %v1665 = vmul.f32 %v1664, %v1647
    %v1666 = vmul.f32 %v1665, %v1664
    %v1667 = vmul.f32 0.5, %v1666
    %v1668 = vsub.f32 1.5, %v1667
    %v1669 = vmul.f32 %v1664, %v1668
    %vm1670 = vweird.f32 %v1647
    %vm1671 = vweird.f32 %v1664
    %vm1672 = vmor %vm1670, %vm1671
    %v1673 = vsel %vm1672, %v1664, %v1669
    %v1674 = vrsqrt.pop %v1648
    %v1675 = vmul.f32 %v1674, %v1648
    %v1676 = vmul.f32 %v1675, %v1674
    %v1677 = vmul.f32 0.5, %v1676
    %v1678 = vsub.f32 1.5, %v1677
    %v1679 = vmul.f32 %v1674, %v1678
    %vm1680 = vweird.f32 %v1648
    %vm1681 = vweird.f32 %v1674
    %vm1682 = vmor %vm1680, %vm1681
    %v1683 = vsel %vm1682, %v1674, %v1679
    %v1684 = vrsqrt.pop %v1649
    %v1685 = vmul.f32 %v1684, %v1649
    %v1686 = vmul.f32 %v1685, %v1684
    %v1687 = vmul.f32 0.5, %v1686
    %v1688 = vsub.f32 1.5, %v1687
    %v1689 = vmul.f32 %v1684, %v1688
    %vm1690 = vweird.f32 %v1649
    %vm1691 = vweird.f32 %v1684
    %vm1692 = vmor %vm1690, %vm1691
    %v1693 = vsel %vm1692, %v1684, %v1689
    %v1694 = vrsqrt.pop %v1650
    %v1695 = vmul.f32 %v1694, %v1650
    %v1696 = vmul.f32 %v1695, %v1694
    %v1697 = vmul.f32 0.5, %v1696
    %v1698 = vsub.f32 1.5, %v1697
    %v1699 = vmul.f32 %v1694, %v1698
    %vm1700 = vweird.f32 %v1650
    %vm1701 = vweird.f32 %v1694
    %vm1702 = vmor %vm1700, %vm1701
    %v1703 = vsel %vm1702, %v1694, %v1699
    %v1704 = vrsqrt.pop %v1651
    %v1705 = vmul.f32 %v1704, %v1651
    %v1706 = vmul.f32 %v1705, %v1704
    %v1707 = vmul.f32 0.5, %v1706
    %v1708 = vsub.f32 1.5, %v1707
    %v1709 = vmul.f32 %v1704, %v1708
    %vm1710 = vweird.f32 %v1651
    %vm1711 = vweird.f32 %v1704
    %vm1712 = vmor %vm1710, %vm1711
    %v1713 = vsel %vm1712, %v1704, %v1709
    %v1714 = vrsqrt.pop %v1652
    %v1715 = vmul.f32 %v1714, %v1652
    %v1716 = vmul.f32 %v1715, %v1714
    %v1717 = vmul.f32 0.5, %v1716
    %v1718 = vsub.f32 1.5, %v1717
    %v1719 = vmul.f32 %v1714, %v1718
    %vm1720 = vweird.f32 %v1652
    %vm1721 = vweird.f32 %v1714
    %vm1722 = vmor %vm1720, %vm1721
    %v1723 = vsel %vm1722, %v1714, %v1719
    %v1724 = vrsqrt.pop %v1653
    %v1725 = vmul.f32 %v1724, %v1653
    %v1726 = vmul.f32 %v1725, %v1724
    %v1727 = vmul.f32 0.5, %v1726
    %v1728 = vsub.f32 1.5, %v1727
    %v1729 = vmul.f32 %v1724, %v1728
    %vm1730 = vweird.f32 %v1653
    %vm1731 = vweird.f32 %v1724
    %vm1732 = vmor %vm1730, %vm1731
    %v1733 = vsel %vm1732, %v1724, %v1729
    %v1734 = vmul.f32 %v1598, %v1663
    %v1735 = vmul.f32 %v1599, %v1673
    %v1736 = vmul.f32 %v1600, %v1683
    %v1737 = vmul.f32 %v1601, %v1693
    %v1738 = vmul.f32 %v1602, %v1703
    %v1739 = vmul.f32 %v1603, %v1713
    %v1740 = vmul.f32 %v1604, %v1723
    %v1741 = vmul.f32 %v1605, %v1733
    %v1742 = vperm.slane %v42, 2
    %v1743 = vmul.f32 %v1734, %v1742
    %v1744 = vmul.f32 %v1735, %v1742
    %v1745 = vmul.f32 %v1736, %v1742
    %v1746 = vmul.f32 %v1737, %v1742
    %v1747 = vmul.f32 %v1738, %v1742
    %v1748 = vmul.f32 %v1739, %v1742
    %v1749 = vmul.f32 %v1740, %v1742
    %v1750 = vmul.f32 %v1741, %v1742
    %1752 = vrot.lane.b32.xlu0 %v1742, 96
    %v1753 = vpop.permute.xlu0 %1752
    %v1755 = vadd.f32 %v1743, %v1753
    %v1756 = vadd.f32 %v1744, %v1753
    %v1757 = vadd.f32 %v1745, %v1753
    %v1758 = vadd.f32 %v1746, %v1753
    %v1759 = vadd.f32 %v1747, %v1753
    %v1760 = vadd.f32 %v1748, %v1753
    %v1761 = vadd.f32 %v1749, %v1753
    %v1762 = vadd.f32 %v1750, %v1753
    %1764 = vrot.lane.b32.xlu0 %v1462, 96
    %v1765 = vpop.permute.xlu0 %1764
    %v1768 = vsel %vm115, %v1755, 0
    %v1771 = vsel %vm115, %v1756, 0
    %v1774 = vsel %vm115, %v1757, 0
    %v1777 = vsel %vm115, %v1758, 0
    %v1780 = vsel %vm115, %v1759, 0
    %v1783 = vsel %vm115, %v1760, 0
    %v1786 = vsel %vm115, %v1761, 0
    %v1789 = vsel %vm115, %v1762, 0
    %1791 = vmatpush.msra.mxu0 0.0
    %1792 = vmatpush.msra.mxu0 0.0
    %1793 = vmatpush.msra.mxu0 0.0
    %1794 = vmatpush.msra.mxu0 0.0
    %1795 = vmatpush.msra.mxu0 0.0
    %1796 = vmatpush.msra.mxu0 0.0
    %1797 = vmatpush.msra.mxu0 0.0
    %1798 = vmatpush.msra.mxu0 0.0
    %1799 = vmatpush.msra.mxu0 0.0
    %1800 = vmatpush.msra.mxu0 0.0
    %1801 = vmatpush.msra.mxu0 0.0
    %1802 = vmatpush.msra.mxu0 0.0
    %1803 = vmatpush.msra.mxu0 %v66
    %1804 = vmatpush.msra.mxu0 %v65
    %1805 = vmatpush.msra.mxu0 %v64
    %1806 = vmatpush.msra.mxu0 %v63
    %1807 = vmatmul.f32.gmra.mxu0 %v1768
    %v1808 = vpop.f32.mrf.mxu0
    %v1809 = vadd.f32 %v1765, %v1808
    %1810 = vmatmul.f32.gmra.mxu0 %v1771
    %v1811 = vpop.f32.mrf.mxu0
    %v1812 = vadd.f32 %v1765, %v1811
    %1813 = vmatmul.f32.gmra.mxu0 %v1774
    %v1814 = vpop.f32.mrf.mxu0
    %v1815 = vadd.f32 %v1765, %v1814
    %1816 = vmatmul.f32.gmra.mxu0 %v1777
    %v1817 = vpop.f32.mrf.mxu0
    %v1818 = vadd.f32 %v1765, %v1817
    %1819 = vmatmul.f32.gmra.mxu0 %v1780
    %v1820 = vpop.f32.mrf.mxu0
    %v1821 = vadd.f32 %v1765, %v1820
    %1822 = vmatmul.f32.gmra.mxu0 %v1783
    %v1823 = vpop.f32.mrf.mxu0
    %v1824 = vadd.f32 %v1765, %v1823
    %1825 = vmatmul.f32.gmra.mxu0 %v1786
    %v1826 = vpop.f32.mrf.mxu0
    %v1827 = vadd.f32 %v1765, %v1826
    %1828 = vmatmul.f32.gmra.mxu0 %v1789
    %v1829 = vpop.f32.mrf.mxu0
    %v1830 = vadd.f32 %v1765, %v1829
    %1831 = vdwg.mxu0
    %vm1832 = vcmp.ge.f32.partialorder %v1809, 0.0
    %vm1833 = vcmp.ge.f32.partialorder %v1812, 0.0
    %vm1834 = vcmp.ge.f32.partialorder %v1815, 0.0
    %vm1835 = vcmp.ge.f32.partialorder %v1818, 0.0
    %vm1836 = vcmp.ge.f32.partialorder %v1821, 0.0
    %vm1837 = vcmp.ge.f32.partialorder %v1824, 0.0
    %vm1838 = vcmp.ge.f32.partialorder %v1827, 0.0
    %vm1839 = vcmp.ge.f32.partialorder %v1830, 0.0
    %v1840 = vmul.f32 %v1809, 0.01
    %v1841 = vmul.f32 %v1812, 0.01
    %v1842 = vmul.f32 %v1815, 0.01
    %v1843 = vmul.f32 %v1818, 0.01
    %v1844 = vmul.f32 %v1821, 0.01
    %v1845 = vmul.f32 %v1824, 0.01
    %v1846 = vmul.f32 %v1827, 0.01
    %v1847 = vmul.f32 %v1830, 0.01
    %v1848 = vsel %vm1832, %v1809, %v1840
    %v1849 = vsel %vm1833, %v1812, %v1841
    %v1850 = vsel %vm1834, %v1815, %v1842
    %v1851 = vsel %vm1835, %v1818, %v1843
    %v1852 = vsel %vm1836, %v1821, %v1844
    %v1853 = vsel %vm1837, %v1824, %v1845
    %v1854 = vsel %vm1838, %v1827, %v1846
    %v1855 = vsel %vm1839, %v1830, %v1847
    %1856 = vrot.lane.b32.xlu0 %v1462, 64
    %v1857 = vpop.permute.xlu0 %1856
    %v1860 = vsel %vm115, %v1848, 0
    %v1863 = vsel %vm115, %v1849, 0
    %v1866 = vsel %vm115, %v1850, 0
    %v1869 = vsel %vm115, %v1851, 0
    %v1872 = vsel %vm115, %v1852, 0
    %v1875 = vsel %vm115, %v1853, 0
    %v1878 = vsel %vm115, %v1854, 0
    %v1881 = vsel %vm115, %v1855, 0
    %1883 = vmatpush.msra.mxu0 0.0
    %1884 = vmatpush.msra.mxu0 0.0
    %1885 = vmatpush.msra.mxu0 0.0
    %1886 = vmatpush.msra.mxu0 0.0
    %1887 = vmatpush.msra.mxu0 0.0
    %1888 = vmatpush.msra.mxu0 0.0
    %1889 = vmatpush.msra.mxu0 0.0
    %1890 = vmatpush.msra.mxu0 0.0
    %1891 = vmatpush.msra.mxu0 0.0
    %1892 = vmatpush.msra.mxu0 0.0
    %1893 = vmatpush.msra.mxu0 0.0
    %1894 = vmatpush.msra.mxu0 0.0
    %1895 = vmatpush.msra.mxu0 %v71
    %1896 = vmatpush.msra.mxu0 %v70
    %1897 = vmatpush.msra.mxu0 %v69
    %1898 = vmatpush.msra.mxu0 %v68
    %1899 = vmatmul.f32.gmra.mxu0 %v1860
    %v1900 = vpop.f32.mrf.mxu0
    %v1901 = vadd.f32 %v1857, %v1900
    %1902 = vmatmul.f32.gmra.mxu0 %v1863
    %v1903 = vpop.f32.mrf.mxu0
    %v1904 = vadd.f32 %v1857, %v1903
    %1905 = vmatmul.f32.gmra.mxu0 %v1866
    %v1906 = vpop.f32.mrf.mxu0
    %v1907 = vadd.f32 %v1857, %v1906
    %1908 = vmatmul.f32.gmra.mxu0 %v1869
    %v1909 = vpop.f32.mrf.mxu0
    %v1910 = vadd.f32 %v1857, %v1909
    %1911 = vmatmul.f32.gmra.mxu0 %v1872
    %v1912 = vpop.f32.mrf.mxu0
    %v1913 = vadd.f32 %v1857, %v1912
    %1914 = vmatmul.f32.gmra.mxu0 %v1875
    %v1915 = vpop.f32.mrf.mxu0
    %v1916 = vadd.f32 %v1857, %v1915
    %1917 = vmatmul.f32.gmra.mxu0 %v1878
    %v1918 = vpop.f32.mrf.mxu0
    %v1919 = vadd.f32 %v1857, %v1918
    %1920 = vmatmul.f32.gmra.mxu0 %v1881
    %v1921 = vpop.f32.mrf.mxu0
    %v1922 = vadd.f32 %v1857, %v1921
    %1923 = vdwg.mxu0
    %v1924 = vsel %vm115, %v1901, 0.0
    %1925 = vadd.xlane.f32.xlu0 %v1924
    %v1926 = vpop.xlane.xlu0 %1925
    %v1927 = vsel %vm115, %v1904, 0.0
    %1928 = vadd.xlane.f32.xlu0 %v1927
    %v1929 = vpop.xlane.xlu0 %1928
    %v1930 = vsel %vm115, %v1907, 0.0
    %1931 = vadd.xlane.f32.xlu0 %v1930
    %v1932 = vpop.xlane.xlu0 %1931
    %v1933 = vsel %vm115, %v1910, 0.0
    %1934 = vadd.xlane.f32.xlu0 %v1933
    %v1935 = vpop.xlane.xlu0 %1934
    %v1936 = vsel %vm115, %v1913, 0.0
    %1937 = vadd.xlane.f32.xlu0 %v1936
    %v1938 = vpop.xlane.xlu0 %1937
    %v1939 = vsel %vm115, %v1916, 0.0
    %1940 = vadd.xlane.f32.xlu0 %v1939
    %v1941 = vpop.xlane.xlu0 %1940
    %v1942 = vsel %vm115, %v1919, 0.0
    %1943 = vadd.xlane.f32.xlu0 %v1942
    %v1944 = vpop.xlane.xlu0 %1943
    %v1945 = vsel %vm115, %v1922, 0.0
    %1946 = vadd.xlane.f32.xlu0 %v1945
    %v1947 = vpop.xlane.xlu0 %1946
    %v1948 = vmul.f32 %v1926, %v1589
    %v1949 = vmul.f32 %v1929, %v1589
    %v1950 = vmul.f32 %v1932, %v1589
    %v1951 = vmul.f32 %v1935, %v1589
    %v1952 = vmul.f32 %v1938, %v1589
    %v1953 = vmul.f32 %v1941, %v1589
    %v1954 = vmul.f32 %v1944, %v1589
    %v1955 = vmul.f32 %v1947, %v1589
    %v1956 = vsub.f32 %v1901, %v1948
    %v1957 = vsub.f32 %v1904, %v1949
    %v1958 = vsub.f32 %v1907, %v1950
    %v1959 = vsub.f32 %v1910, %v1951
    %v1960 = vsub.f32 %v1913, %v1952
    %v1961 = vsub.f32 %v1916, %v1953
    %v1962 = vsub.f32 %v1919, %v1954
    %v1963 = vsub.f32 %v1922, %v1955
    %v1964 = vmul.f32 %v1956, %v1956
    %v1965 = vmul.f32 %v1957, %v1957
    %v1966 = vmul.f32 %v1958, %v1958
    %v1967 = vmul.f32 %v1959, %v1959
    %v1968 = vmul.f32 %v1960, %v1960
    %v1969 = vmul.f32 %v1961, %v1961
    %v1970 = vmul.f32 %v1962, %v1962
    %v1971 = vmul.f32 %v1963, %v1963
    %v1972 = vsel %vm115, %v1964, 0.0
    %1973 = vadd.xlane.f32.xlu0 %v1972
    %v1974 = vpop.xlane.xlu0 %1973
    %v1975 = vsel %vm115, %v1965, 0.0
    %1976 = vadd.xlane.f32.xlu0 %v1975
    %v1977 = vpop.xlane.xlu0 %1976
    %v1978 = vsel %vm115, %v1966, 0.0
    %1979 = vadd.xlane.f32.xlu0 %v1978
    %v1980 = vpop.xlane.xlu0 %1979
    %v1981 = vsel %vm115, %v1967, 0.0
    %1982 = vadd.xlane.f32.xlu0 %v1981
    %v1983 = vpop.xlane.xlu0 %1982
    %v1984 = vsel %vm115, %v1968, 0.0
    %1985 = vadd.xlane.f32.xlu0 %v1984
    %v1986 = vpop.xlane.xlu0 %1985
    %v1987 = vsel %vm115, %v1969, 0.0
    %1988 = vadd.xlane.f32.xlu0 %v1987
    %v1989 = vpop.xlane.xlu0 %1988
    %v1990 = vsel %vm115, %v1970, 0.0
    %1991 = vadd.xlane.f32.xlu0 %v1990
    %v1992 = vpop.xlane.xlu0 %1991
    %v1993 = vsel %vm115, %v1971, 0.0
    %1994 = vadd.xlane.f32.xlu0 %v1993
    %v1995 = vpop.xlane.xlu0 %1994
    %v1996 = vmul.f32 %v1974, %v1589
    %v1997 = vmul.f32 %v1977, %v1589
    %v1998 = vmul.f32 %v1980, %v1589
    %v1999 = vmul.f32 %v1983, %v1589
    %v2000 = vmul.f32 %v1986, %v1589
    %v2001 = vmul.f32 %v1989, %v1589
    %v2002 = vmul.f32 %v1992, %v1589
    %v2003 = vmul.f32 %v1995, %v1589
    %v2004 = vadd.f32 %v1996, 1e-05
    %v2005 = vadd.f32 %v1997, 1e-05
    %v2006 = vadd.f32 %v1998, 1e-05
    %v2007 = vadd.f32 %v1999, 1e-05
    %v2008 = vadd.f32 %v2000, 1e-05
    %v2009 = vadd.f32 %v2001, 1e-05
    %v2010 = vadd.f32 %v2002, 1e-05
    %v2011 = vadd.f32 %v2003, 1e-05
    %v2012 = vrsqrt.pop %v2004
    %v2013 = vmul.f32 %v2012, %v2004
    %v2014 = vmul.f32 %v2013, %v2012
    %v2015 = vmul.f32 0.5, %v2014
    %v2016 = vsub.f32 1.5, %v2015
    %v2017 = vmul.f32 %v2012, %v2016
    %vm2018 = vweird.f32 %v2004
    %vm2019 = vweird.f32 %v2012
    %vm2020 = vmor %vm2018, %vm2019
    %v2021 = vsel %vm2020, %v2012, %v2017
    %v2022 = vrsqrt.pop %v2005
    %v2023 = vmul.f32 %v2022, %v2005
    %v2024 = vmul.f32 %v2023, %v2022
    %v2025 = vmul.f32 0.5, %v2024
    %v2026 = vsub.f32 1.5, %v2025
    %v2027 = vmul.f32 %v2022, %v2026
    %vm2028 = vweird.f32 %v2005
    %vm2029 = vweird.f32 %v2022
    %vm2030 = vmor %vm2028, %vm2029
    %v2031 = vsel %vm2030, %v2022, %v2027
    %v2032 = vrsqrt.pop %v2006
    %v2033 = vmul.f32 %v2032, %v2006
    %v2034 = vmul.f32 %v2033, %v2032
    %v2035 = vmul.f32 0.5, %v2034
    %v2036 = vsub.f32 1.5, %v2035
    %v2037 = vmul.f32 %v2032, %v2036
    %vm2038 = vweird.f32 %v2006
    %vm2039 = vweird.f32 %v2032
    %vm2040 = vmor %vm2038, %vm2039
    %v2041 = vsel %vm2040, %v2032, %v2037
    %v2042 = vrsqrt.pop %v2007
    %v2043 = vmul.f32 %v2042, %v2007
    %v2044 = vmul.f32 %v2043, %v2042
    %v2045 = vmul.f32 0.5, %v2044
    %v2046 = vsub.f32 1.5, %v2045
    %v2047 = vmul.f32 %v2042, %v2046
    %vm2048 = vweird.f32 %v2007
    %vm2049 = vweird.f32 %v2042
    %vm2050 = vmor %vm2048, %vm2049
    %v2051 = vsel %vm2050, %v2042, %v2047
    %v2052 = vrsqrt.pop %v2008
    %v2053 = vmul.f32 %v2052, %v2008
    %v2054 = vmul.f32 %v2053, %v2052
    %v2055 = vmul.f32 0.5, %v2054
    %v2056 = vsub.f32 1.5, %v2055
    %v2057 = vmul.f32 %v2052, %v2056
    %vm2058 = vweird.f32 %v2008
    %vm2059 = vweird.f32 %v2052
    %vm2060 = vmor %vm2058, %vm2059
    %v2061 = vsel %vm2060, %v2052, %v2057
    %v2062 = vrsqrt.pop %v2009
    %v2063 = vmul.f32 %v2062, %v2009
    %v2064 = vmul.f32 %v2063, %v2062
    %v2065 = vmul.f32 0.5, %v2064
    %v2066 = vsub.f32 1.5, %v2065
    %v2067 = vmul.f32 %v2062, %v2066
    %vm2068 = vweird.f32 %v2009
    %vm2069 = vweird.f32 %v2062
    %vm2070 = vmor %vm2068, %vm2069
    %v2071 = vsel %vm2070, %v2062, %v2067
    %v2072 = vrsqrt.pop %v2010
    %v2073 = vmul.f32 %v2072, %v2010
    %v2074 = vmul.f32 %v2073, %v2072
    %v2075 = vmul.f32 0.5, %v2074
    %v2076 = vsub.f32 1.5, %v2075
    %v2077 = vmul.f32 %v2072, %v2076
    %vm2078 = vweird.f32 %v2010
    %vm2079 = vweird.f32 %v2072
    %vm2080 = vmor %vm2078, %vm2079
    %v2081 = vsel %vm2080, %v2072, %v2077
    %v2082 = vrsqrt.pop %v2011
    %v2083 = vmul.f32 %v2082, %v2011
    %v2084 = vmul.f32 %v2083, %v2082
    %v2085 = vmul.f32 0.5, %v2084
    %v2086 = vsub.f32 1.5, %v2085
    %v2087 = vmul.f32 %v2082, %v2086
    %vm2088 = vweird.f32 %v2011
    %vm2089 = vweird.f32 %v2082
    %vm2090 = vmor %vm2088, %vm2089
    %v2091 = vsel %vm2090, %v2082, %v2087
    %v2092 = vmul.f32 %v1956, %v2021
    %v2093 = vmul.f32 %v1957, %v2031
    %v2094 = vmul.f32 %v1958, %v2041
    %v2095 = vmul.f32 %v1959, %v2051
    %v2096 = vmul.f32 %v1960, %v2061
    %v2097 = vmul.f32 %v1961, %v2071
    %v2098 = vmul.f32 %v1962, %v2081
    %v2099 = vmul.f32 %v1963, %v2091
    %2100 = vrot.lane.b32.xlu0 %v1742, 64
    %v2101 = vpop.permute.xlu0 %2100
    %v2103 = vmul.f32 %v2092, %v2101
    %v2104 = vmul.f32 %v2093, %v2101
    %v2105 = vmul.f32 %v2094, %v2101
    %v2106 = vmul.f32 %v2095, %v2101
    %v2107 = vmul.f32 %v2096, %v2101
    %v2108 = vmul.f32 %v2097, %v2101
    %v2109 = vmul.f32 %v2098, %v2101
    %v2110 = vmul.f32 %v2099, %v2101
    %2111 = vrot.lane.b32.xlu0 %v1742, 32
    %v2112 = vpop.permute.xlu0 %2111
    %v2114 = vadd.f32 %v2103, %v2112
    %v2115 = vadd.f32 %v2104, %v2112
    %v2116 = vadd.f32 %v2105, %v2112
    %v2117 = vadd.f32 %v2106, %v2112
    %v2118 = vadd.f32 %v2107, %v2112
    %v2119 = vadd.f32 %v2108, %v2112
    %v2120 = vadd.f32 %v2109, %v2112
    %v2121 = vadd.f32 %v2110, %v2112
    %2123 = vrot.lane.b32.xlu0 %v2115, 32
    %v2124 = vpop.permute.xlu0 %2123
    %2127 = vrot.lane.b32.xlu0 %v2116, 64
    %v2128 = vpop.permute.xlu0 %2127
    %2131 = vrot.lane.b32.xlu0 %v2117, 96
    %v2132 = vpop.permute.xlu0 %2131
    %2135 = vrot.lane.b32.xlu0 %v2119, 32
    %v2136 = vpop.permute.xlu0 %2135
    %2139 = vrot.lane.b32.xlu0 %v2120, 64
    %v2140 = vpop.permute.xlu0 %2139
    %2143 = vrot.lane.b32.xlu0 %v2121, 96
    %v2144 = vpop.permute.xlu0 %2143
    %2147 = vrot.lane.b32.xlu0 %v139, 32
    %v2148 = vpop.permute.xlu0 %2147
    %2151 = vrot.lane.b32.xlu0 %v168, 64
    %v2152 = vpop.permute.xlu0 %2151
    %2154 = vrot.lane.b32.xlu0 %v221, 96
    %v2155 = vpop.permute.xlu0 %2154
    %v2157 = vsel %vm115, %v2114, %v2124
    %vm2158 = vcmask 523264
    %v2159 = vsel %vm2158, %v2157, %v2128
    %vm2160 = vcmask 785408
    %v2161 = vsel %vm2160, %v2159, %v2132
    %v2162 = vsel %vm115, %v2118, %v2136
    %v2163 = vsel %vm2158, %v2162, %v2140
    %v2164 = vsel %vm2160, %v2163, %v2144
    %v2165 = vsel %vm115, %v108, %v2148
    %v2166 = vsel %vm2158, %v2165, %v2152
    %v2167 = vsel %vm2160, %v2166, %v2155
    %2168 = vst [vmem:[%s7] sm:$0xff] %v2161
    %2169 = vst [vmem:[%s7 + $0x8] sm:$0xff] %v2164
    %2170 = vst [vmem:[%s7 + $0x10] sm:$0xff] %v2167
    // Predicated region
    $region34: #{ceda_forward.1} parent=1 // pred_check
      _
    $region35: #{ceda_forward.1} parent=1 // pred_check_branch
      %2172 = sbr.rel (0) target = $region37
    $region36: #{ceda_forward.1} parent=1 // pred_region
      _
    $region37: #{ceda_forward.1} parent=1 // pred_fallthru
      _
    // Predicated region
    $region38: #{ceda_forward.1} parent=1 // pred_check
      _
    $region39: #{ceda_forward.1} parent=1 // pred_check_branch
      %2174 = sbr.rel (0) target = $region41
    $region40: #{ceda_forward.1} parent=1 // pred_region
      _
    $region41: #{ceda_forward.1} parent=1 // pred_fallthru
      _
    %2175 = vsyncpa [#allocation3], 1

</llo_original>
